<compile_context>
chip_gen: v5e
topology: v5e:2x2
jax: 0.10.0
libtpu: 0.0.40
codegen_flags: <defaults>
</compile_context>

<pallas_src>
import math
from functools import partial

import jax
import jax.numpy as jnp
from jax import lax
from jax.experimental import pallas as pl
from jax.experimental.pallas import tpu as pltpu


# ----------------------------- small config -----------------------------
class Config:
    block_size = 16
    vocab_size = 128     # keeps the logits output lane-dense (last dim = 128)
    n_layer = 2
    n_head = 4
    n_embd = 32


# ----------------------------- math helpers -----------------------------
def _layernorm(x, gamma, beta, eps=1e-5):
    mu = jnp.mean(x, axis=-1, keepdims=True)
    var = jnp.mean((x - mu) ** 2, axis=-1, keepdims=True)
    return (x - mu) * lax.rsqrt(var + eps) * gamma + beta


def _gelu_tanh(x):
    c = math.sqrt(2.0 / math.pi)
    return 0.5 * x * (1.0 + jnp.tanh(c * (x + 0.044715 * x * x * x)))


def _mm(a, b):
    """bf16 MXU matmul with f32 accumulation."""
    return jnp.dot(a.astype(jnp.bfloat16), b.astype(jnp.bfloat16),
                   preferred_element_type=jnp.float32)


# ----------------------- fused per-(batch, layer) kernel ------------------
def gpt2_kernel(x_ref,
                ln1_g_ref, ln1_b_ref, w_qkv_ref, b_qkv_ref,
                w_proj_ref, b_proj_ref, ln2_g_ref, ln2_b_ref,
                w_fc_ref, b_fc_ref, w_mp_ref, b_mp_ref,
                lnf_g_ref, lnf_b_ref, wte_t_ref,
                out_ref, x_scr, *, n_head):
    l = pl.program_id(1)
    n_layer = pl.num_programs(1)

    # Load the (T, C) activation slab for this batch element once (l == 0).
    @pl.when(l == 0)
    def _():
        x_scr[...] = x_ref[0]

    T, C = x_scr.shape
    Dh = C // n_head
    scale = 1.0 / math.sqrt(Dh)

    x = x_scr[...]                                    # (T, C) f32

    # Causal mask built in-kernel: two iotas + one compare (VPU, ~free);
    # no O(T^2) f32 HBM->VMEM input.
    row = lax.broadcasted_iota(jnp.int32, (T, T), 0)
    col = lax.broadcasted_iota(jnp.int32, (T, T), 1)
    causal = col <= row

    # ---- attention branch: ln_1 -> c_attn -> causal SDPA -> c_proj ----
    h = _layernorm(x, ln1_g_ref[0], ln1_b_ref[0])
    qkv = _mm(h, w_qkv_ref[0]) + b_qkv_ref[0]         # (T, 3C)
    w_proj = w_proj_ref[0]                            # (C, C) bf16
    att = jnp.zeros((T, C), jnp.float32)
    # TODO(synk): at real GPT-2 head counts (12+), convert this static Python
    #             loop into lax.fori_loop(..., unroll=True) to bound live vregs.
    for hh in range(n_head):
        lo = hh * Dh
        qh = qkv[:, lo:lo + Dh]
        kh = qkv[:, C + lo:C + lo + Dh]
        vh = qkv[:, 2 * C + lo:2 * C + lo + Dh]
        # Contract the Dh axes directly -> no explicit kh.T (XLU transpose).
        s = lax.dot_general(qh.astype(jnp.bfloat16), kh.astype(jnp.bfloat16),
                            (((1,), (1,)), ((), ())),
                            preferred_element_type=jnp.float32) * scale
        s = jnp.where(causal, s, -1e30)
        s = s - jnp.max(s, axis=-1, keepdims=True)
        p = jnp.exp(s)
        # Divide -> EUP reciprocal + VPU multiply (frees VALU slots).
        p = p * pl.reciprocal(jnp.sum(p, axis=-1, keepdims=True), approx=True)
        oh = _mm(p, vh)                               # (T, Dh)
        # Accumulate straight into the output projection: no concatenate.
        att = att + _mm(oh, w_proj[lo:lo + Dh, :])
    x = x + att + b_proj_ref[0]

    # ---- MLP branch: ln_2 -> c_fc -> gelu(tanh) -> c_proj ----
    h2 = _layernorm(x, ln2_g_ref[0], ln2_b_ref[0])
    hf = _gelu_tanh(_mm(h2, w_fc_ref[0]) + b_fc_ref[0])
    x = x + _mm(hf, w_mp_ref[0]) + b_mp_ref[0]

    x_scr[...] = x

    # ---- final LayerNorm + tied lm_head on the last layer step ----
    @pl.when(l == n_layer - 1)
    def _():
        hn = _layernorm(x, lnf_g_ref[...], lnf_b_ref[...])
        # wte is pre-transposed to (C, V) host-side: plain lane-dense matmul,
        # unmasked stores (V = 128).
        out_ref[0] = _mm(hn, wte_t_ref[...])


# ------------------------------ wrapper ----------------------------------
def gpt2_forward(idx, params, cfg: Config):
    B, T = idx.shape
    assert T <= cfg.block_size
    C, V, L = cfg.n_embd, cfg.vocab_size, cfg.n_layer

    # Token + position embedding lookup: host-side glue (gather).
    # TODO(synk): no clean BlockSpec equivalent for the embedding gather; keep
    #             it as XLA glue (or do a manual DMA-gather kernel at scale).
    x = (jnp.take(params['wte'], idx, axis=0)
         + params['wpe'][:T][None]).astype(jnp.float32)          # (B, T, C)

    bf = lambda w: w.astype(jnp.bfloat16)     # cast weights once per call
    wte_t = bf(params['wte'].T)               # (C, V) pre-transposed lm_head

    args = (x,
            params['ln1_g'], params['ln1_b'], bf(params['w_qkv']), params['b_qkv'],
            bf(params['w_proj']), params['b_proj'],
            params['ln2_g'], params['ln2_b'],
            bf(params['w_fc']), params['b_fc'], bf(params['w_mp']), params['b_mp'],
            params['lnf_g'], params['lnf_b'], wte_t)

    def per_layer(shape):
        return pl.BlockSpec((1,) + shape, lambda b, l: (l,) + (0,) * len(shape))

    def shared(shape):
        return pl.BlockSpec(shape, lambda b, l: (0,) * len(shape))

    in_specs = [
        pl.BlockSpec((1, T, C), lambda b, l: (b, 0, 0)),   # x (per batch elt)
        per_layer((1, C)), per_layer((1, C)),              # ln_1 gamma/beta
        per_layer((C, 3 * C)), per_layer((1, 3 * C)),      # c_attn
        per_layer((C, C)), per_layer((1, C)),              # attn c_proj
        per_layer((1, C)), per_layer((1, C)),              # ln_2 gamma/beta
        per_layer((C, 4 * C)), per_layer((1, 4 * C)),      # c_fc
        per_layer((4 * C, C)), per_layer((1, C)),          # mlp c_proj
        shared((1, C)), shared((1, C)),                    # ln_f gamma/beta
        shared((C, V)),                                    # wte^T (lm_head)
    ]

    logits = pl.pallas_call(
        partial(gpt2_kernel, n_head=cfg.n_head),
        out_shape=jax.ShapeDtypeStruct((B, T, V), jnp.float32),
        grid_spec=pltpu.PrefetchScalarGridSpec(
            num_scalar_prefetch=0,
            grid=(B, L),
            in_specs=in_specs,
            out_specs=pl.BlockSpec((1, T, V), lambda b, l: (b, 0, 0)),
            scratch_shapes=[pltpu.VMEM((T, C), jnp.float32)],   # resident acts
        ),
        compiler_params=pltpu.CompilerParams(
            # batch axis splits across TensorCores on v7x; layer axis streams
            # per-layer weights (double-buffered) and carries the activation
            # scratch, so it must be "arbitrary".
            dimension_semantics=("parallel", "arbitrary"),
            vmem_limit_bytes=64 * 1024 * 1024,
        ),
    )(*args)
    return logits


# --------------------------- pure-JAX f32 reference -------------------------
def ref_forward(idx, params, cfg: Config):
    B, T = idx.shape
    C, H = cfg.n_embd, cfg.n_head
    Dh = C // H
    x = jnp.take(params['wte'], idx, axis=0) + params['wpe'][:T][None]
    row = lax.broadcasted_iota(jnp.int32, (T, T), 0)
    col = lax.broadcasted_iota(jnp.int32, (T, T), 1)
    causal = col <= row
    for l in range(cfg.n_layer):
        h = _layernorm(x, params['ln1_g'][l], params['ln1_b'][l])
        qkv = h @ params['w_qkv'][l] + params['b_qkv'][l]
        q, k, v = qkv[..., :C], qkv[..., C:2 * C], qkv[..., 2 * C:]
        q = q.reshape(B, T, H, Dh).transpose(0, 2, 1, 3)
        k = k.reshape(B, T, H, Dh).transpose(0, 2, 1, 3)
        v = v.reshape(B, T, H, Dh).transpose(0, 2, 1, 3)
        s = jnp.einsum('bhqd,bhkd->bhqk', q, k) / math.sqrt(Dh)
        s = jnp.where(causal, s, -1e30)
        p = jax.nn.softmax(s, axis=-1)
        a = jnp.einsum('bhqk,bhkd->bhqd', p, v).transpose(0, 2, 1, 3).reshape(B, T, C)
        x = x + (a @ params['w_proj'][l] + params['b_proj'][l])
        h2 = _layernorm(x, params['ln2_g'][l], params['ln2_b'][l])
        x = x + (_gelu_tanh(h2 @ params['w_fc'][l] + params['b_fc'][l])
                 @ params['w_mp'][l] + params['b_mp'][l])
    x = _layernorm(x, params['lnf_g'], params['lnf_b'])
    return x @ params['wte'].T


# ------------------------------- params ------------------------------------
def init_params(key, cfg: Config):
    C, V, L = cfg.n_embd, cfg.vocab_size, cfg.n_layer
    std = 0.02
    proj_std = std * (2 * L) ** (-0.5)
    k = jax.random.split(key, 6)
    return {
        'wte': std * jax.random.normal(k[0], (V, C), jnp.float32),
        'wpe': std * jax.random.normal(k[1], (cfg.block_size, C), jnp.float32),
        'lnf_g': jnp.ones((1, C), jnp.float32),
        'lnf_b': jnp.zeros((1, C), jnp.float32),
        # per-layer weights stacked on a leading L axis (streamed per layer)
        'ln1_g': jnp.ones((L, 1, C), jnp.float32),
        'ln1_b': jnp.zeros((L, 1, C), jnp.float32),
        'ln2_g': jnp.ones((L, 1, C), jnp.float32),
        'ln2_b': jnp.zeros((L, 1, C), jnp.float32),
        'w_qkv': std * jax.random.normal(k[2], (L, C, 3 * C), jnp.float32),
        'b_qkv': jnp.zeros((L, 1, 3 * C), jnp.float32),
        'w_proj': proj_std * jax.random.normal(k[3], (L, C, C), jnp.float32),
        'b_proj': jnp.zeros((L, 1, C), jnp.float32),
        'w_fc': std * jax.random.normal(k[4], (L, C, 4 * C), jnp.float32),
        'b_fc': jnp.zeros((L, 1, 4 * C), jnp.float32),
        'w_mp': std * jax.random.normal(k[5], (L, 4 * C, C), jnp.float32),
        'b_mp': jnp.zeros((L, 1, C), jnp.float32),
    }


# --------------------------------- main -------------------------------------
if __name__ == "__main__":
    cfg = Config()
    key = jax.random.PRNGKey(0)
    kp, ki = jax.random.split(key)
    params = init_params(kp, cfg)

    B, T = 2, 8
    idx = jax.random.randint(ki, (B, T), 0, cfg.vocab_size, dtype=jnp.int32)

    fwd = jax.jit(partial(gpt2_forward, cfg=cfg))
    logits = jax.block_until_ready(fwd(idx, params))

    ref = jax.block_until_ready(ref_forward(idx, params, cfg))
    assert logits.shape == (B, T, cfg.vocab_size)
    assert bool(jnp.all(jnp.isfinite(logits)))
    # Tolerance relaxed vs. the pure-f32 reference because the kernel feeds
    # bf16 matmul operands (f32 accumulation) and uses approx reciprocal.
    max_err = float(jnp.max(jnp.abs(logits - ref)))
    assert jnp.allclose(logits, ref, atol=3e-2, rtol=3e-2), max_err

    print("KERNEL_OK")
</pallas_src>

<mosaic_0001>
module attributes {stable_mosaic.version = 11 : i64} {
  func.func @gpt2_kernel(%arg0: i32, %arg1: i32, %arg2: memref<1x8x32xf32, #tpu.memory_space<vmem>>, %arg3: memref<1x1x32xf32, #tpu.memory_space<vmem>>, %arg4: memref<1x1x32xf32, #tpu.memory_space<vmem>>, %arg5: memref<1x32x96xbf16, #tpu.memory_space<vmem>>, %arg6: memref<1x1x96xf32, #tpu.memory_space<vmem>>, %arg7: memref<1x32x32xbf16, #tpu.memory_space<vmem>>, %arg8: memref<1x1x32xf32, #tpu.memory_space<vmem>>, %arg9: memref<1x1x32xf32, #tpu.memory_space<vmem>>, %arg10: memref<1x1x32xf32, #tpu.memory_space<vmem>>, %arg11: memref<1x32x128xbf16, #tpu.memory_space<vmem>>, %arg12: memref<1x1x128xf32, #tpu.memory_space<vmem>>, %arg13: memref<1x128x32xbf16, #tpu.memory_space<vmem>>, %arg14: memref<1x1x32xf32, #tpu.memory_space<vmem>>, %arg15: memref<1x32xf32, #tpu.memory_space<vmem>>, %arg16: memref<1x32xf32, #tpu.memory_space<vmem>>, %arg17: memref<32x128xbf16, #tpu.memory_space<vmem>>, %arg18: memref<1x8x128xf32, #tpu.memory_space<vmem>>, %arg19: memref<8x32xf32, #tpu.memory_space<vmem>>) attributes {dimension_semantics = [#tpu.dimension_semantics<parallel>, #tpu.dimension_semantics<arbitrary>], iteration_bounds = array<i64: 2, 2>, scalar_prefetch = 0 : i64, scratch_operands = 1 : i64, tpu.core_type = #tpu.core_type<tc>, window_params = [{transform_indices = @transform_0, window_bounds = array<i64: 1, 8, 32>}, {transform_indices = @transform_1, window_bounds = array<i64: 1, 1, 32>}, {transform_indices = @transform_2, window_bounds = array<i64: 1, 1, 32>}, {transform_indices = @transform_3, window_bounds = array<i64: 1, 32, 96>}, {transform_indices = @transform_4, window_bounds = array<i64: 1, 1, 96>}, {transform_indices = @transform_5, window_bounds = array<i64: 1, 32, 32>}, {transform_indices = @transform_6, window_bounds = array<i64: 1, 1, 32>}, {transform_indices = @transform_7, window_bounds = array<i64: 1, 1, 32>}, {transform_indices = @transform_8, window_bounds = array<i64: 1, 1, 32>}, {transform_indices = @transform_9, window_bounds = array<i64: 1, 32, 128>}, {transform_indices = @transform_10, window_bounds = array<i64: 1, 1, 128>}, {transform_indices = @transform_11, window_bounds = array<i64: 1, 128, 32>}, {transform_indices = @transform_12, window_bounds = array<i64: 1, 1, 32>}, {pipeline_mode = #tpu.pipeline_mode<synchronous>, transform_indices = @transform_13, window_bounds = array<i64: 1, 32>}, {pipeline_mode = #tpu.pipeline_mode<synchronous>, transform_indices = @transform_14, window_bounds = array<i64: 1, 32>}, {pipeline_mode = #tpu.pipeline_mode<synchronous>, transform_indices = @transform_15, window_bounds = array<i64: 32, 128>}, {transform_indices = @transform_16, window_bounds = array<i64: 1, 8, 128>}]} {
    %c0_i32 = arith.constant 0 : i32
    %0 = arith.cmpi eq, %arg1, %c0_i32 : i32
    %1 = arith.extui %0 : i1 to i32
    %c0_i32_0 = arith.constant 0 : i32
    %2 = arith.cmpi ne, %1, %c0_i32_0 : i32
    scf.if %2 {
      %c0_86 = arith.constant 0 : index
      %c0_87 = arith.constant 0 : index
      %c0_88 = arith.constant 0 : index
      %217 = vector.load %arg2[%c0_86, %c0_87, %c0_88] : memref<1x8x32xf32, #tpu.memory_space<vmem>>, vector<1x8x32xf32>
      %218 = vector.shape_cast %217 : vector<1x8x32xf32> to vector<8x32xf32>
      %c0_89 = arith.constant 0 : index
      %c0_90 = arith.constant 0 : index
      %219 = vector.load %arg19[%c0_89, %c0_90] : memref<8x32xf32, #tpu.memory_space<vmem>>, vector<8x32xf32>
      tpu.vector_store %arg19[%c0_89, %c0_90], %218 {strides = array<i32>} : memref<8x32xf32, #tpu.memory_space<vmem>>, vector<8x32xf32>,
    } else {
    }
    %c0 = arith.constant 0 : index
    %c0_1 = arith.constant 0 : index
    %3 = vector.load %arg19[%c0, %c0_1] : memref<8x32xf32, #tpu.memory_space<vmem>>, vector<8x32xf32>
    %4 = tpu.iota {dimensions = array<i32: 0>} : vector<8x8xi32>
    %5 = tpu.iota {dimensions = array<i32: 1>} : vector<8x8xi32>
    %6 = arith.cmpi sle, %5, %4 : vector<8x8xi32>
    %c0_2 = arith.constant 0 : index
    %c0_3 = arith.constant 0 : index
    %c0_4 = arith.constant 0 : index
    %7 = vector.load %arg3[%c0_2, %c0_3, %c0_4] : memref<1x1x32xf32, #tpu.memory_space<vmem>>, vector<1x1x32xf32>
    %8 = vector.shape_cast %7 : vector<1x1x32xf32> to vector<1x32xf32>
    %c0_5 = arith.constant 0 : index
    %c0_6 = arith.constant 0 : index
    %c0_7 = arith.constant 0 : index
    %9 = vector.load %arg4[%c0_5, %c0_6, %c0_7] : memref<1x1x32xf32, #tpu.memory_space<vmem>>, vector<1x1x32xf32>
    %10 = vector.shape_cast %9 : vector<1x1x32xf32> to vector<1x32xf32>
    %cst = arith.constant dense<0.000000e+00> : vector<8xf32>
    %11 = vector.multi_reduction <add>, %3, %cst [1] : vector<8x32xf32> to vector<8xf32>
    %12 = vector.shape_cast %11 : vector<8xf32> to vector<8x1xf32>
    %cst_8 = arith.constant 3.200000e+01 : f32
    %13 = vector.broadcast %cst_8 : f32 to vector<8x1xf32>
    %14 = arith.divf %12, %13 : vector<8x1xf32>
    %15 = vector.broadcast %14 : vector<8x1xf32> to vector<8x32xf32>
    %16 = arith.subf %3, %15 : vector<8x32xf32>
    %17 = arith.mulf %16, %16 : vector<8x32xf32>
    %cst_9 = arith.constant dense<0.000000e+00> : vector<8xf32>
    %18 = vector.multi_reduction <add>, %17, %cst_9 [1] : vector<8x32xf32> to vector<8xf32>
    %19 = vector.shape_cast %18 : vector<8xf32> to vector<8x1xf32>
    %cst_10 = arith.constant 3.200000e+01 : f32
    %20 = vector.broadcast %cst_10 : f32 to vector<8x1xf32>
    %21 = arith.divf %19, %20 : vector<8x1xf32>
    %22 = vector.broadcast %14 : vector<8x1xf32> to vector<8x32xf32>
    %23 = arith.subf %3, %22 : vector<8x32xf32>
    %cst_11 = arith.constant 9.99999974E-6 : f32
    %24 = vector.broadcast %cst_11 : f32 to vector<8x1xf32>
    %25 = arith.addf %21, %24 : vector<8x1xf32>
    %26 = math.rsqrt %25 : vector<8x1xf32>
    %27 = vector.broadcast %26 : vector<8x1xf32> to vector<8x32xf32>
    %28 = arith.mulf %23, %27 : vector<8x32xf32>
    %29 = vector.broadcast %8 : vector<1x32xf32> to vector<8x32xf32>
    %30 = arith.mulf %28, %29 : vector<8x32xf32>
    %31 = vector.broadcast %10 : vector<1x32xf32> to vector<8x32xf32>
    %32 = arith.addf %30, %31 : vector<8x32xf32>
    %c0_12 = arith.constant 0 : index
    %c0_13 = arith.constant 0 : index
    %c0_14 = arith.constant 0 : index
    %33 = vector.load %arg5[%c0_12, %c0_13, %c0_14] : memref<1x32x96xbf16, #tpu.memory_space<vmem>>, vector<1x32x96xbf16>
    %34 = vector.shape_cast %33 : vector<1x32x96xbf16> to vector<32x96xbf16>
    %35 = arith.truncf %32 : vector<8x32xf32> to vector<8x32xbf16>
    %cst_15 = arith.constant dense<0.000000e+00> : vector<8x96xf32>
    %36 = tpu.matmul %35, %34, %cst_15 {dimension_numbers = #tpu.dot_dimension_numbers<[1], [0], [0], [1], [0, 0, 1, 1], [], []>} : vector<8x32xbf16>, vector<32x96xbf16>, vector<8x96xf32> -> vector<8x96xf32>
    %c0_16 = arith.constant 0 : index
    %c0_17 = arith.constant 0 : index
    %c0_18 = arith.constant 0 : index
    %37 = vector.load %arg6[%c0_16, %c0_17, %c0_18] : memref<1x1x96xf32, #tpu.memory_space<vmem>>, vector<1x1x96xf32>
    %38 = vector.shape_cast %37 : vector<1x1x96xf32> to vector<1x96xf32>
    %39 = vector.broadcast %38 : vector<1x96xf32> to vector<8x96xf32>
    %40 = arith.addf %36, %39 : vector<8x96xf32>
    %c0_19 = arith.constant 0 : index
    %c0_20 = arith.constant 0 : index
    %c0_21 = arith.constant 0 : index
    %41 = vector.load %arg7[%c0_19, %c0_20, %c0_21] : memref<1x32x32xbf16, #tpu.memory_space<vmem>>, vector<1x32x32xbf16>
    %42 = vector.shape_cast %41 : vector<1x32x32xbf16> to vector<32x32xbf16>
    %cst_22 = arith.constant 0.000000e+00 : f32
    %43 = vector.broadcast %cst_22 : f32 to vector<8x32xf32>
    %44 = vector.extract_strided_slice %40 {offsets = [0, 0], sizes = [8, 8], strides = [1, 1]} : vector<8x96xf32> to vector<8x8xf32>
    %45 = vector.extract_strided_slice %40 {offsets = [0, 32], sizes = [8, 8], strides = [1, 1]} : vector<8x96xf32> to vector<8x8xf32>
    %46 = vector.extract_strided_slice %40 {offsets = [0, 64], sizes = [8, 8], strides = [1, 1]} : vector<8x96xf32> to vector<8x8xf32>
    %47 = arith.truncf %44 : vector<8x8xf32> to vector<8x8xbf16>
    %48 = arith.truncf %45 : vector<8x8xf32> to vector<8x8xbf16>
    %cst_23 = arith.constant dense<0.000000e+00> : vector<8x8xf32>
    %49 = tpu.matmul %47, %48, %cst_23 {dimension_numbers = #tpu.dot_dimension_numbers<[1], [1], [0], [0], [0, 0, 1, 0], [], []>} : vector<8x8xbf16>, vector<8x8xbf16>, vector<8x8xf32> -> vector<8x8xf32>
    %cst_24 = arith.constant 0.353553385 : f32
    %50 = vector.broadcast %cst_24 : f32 to vector<8x8xf32>
    %51 = arith.mulf %49, %50 : vector<8x8xf32>
    %cst_25 = arith.constant -1.000000e+30 : f32
    %52 = vector.broadcast %cst_25 : f32 to vector<8x8xf32>
    %53 = arith.select %6, %51, %52 : vector<8x8xi1>, vector<8x8xf32>
    %cst_26 = arith.constant dense<0xFF800000> : vector<8xf32>
    %54 = vector.multi_reduction <maximumf>, %53, %cst_26 [1] : vector<8x8xf32> to vector<8xf32>
    %55 = vector.shape_cast %54 : vector<8xf32> to vector<8x1xf32>
    %56 = vector.broadcast %55 : vector<8x1xf32> to vector<8x8xf32>
    %57 = arith.subf %53, %56 : vector<8x8xf32>
    %58 = math.exp %57 : vector<8x8xf32>
    %cst_27 = arith.constant dense<0.000000e+00> : vector<8xf32>
    %59 = vector.multi_reduction <add>, %58, %cst_27 [1] : vector<8x8xf32> to vector<8xf32>
    %60 = vector.shape_cast %59 : vector<8xf32> to vector<8x1xf32>
    %61 = tpu.reciprocal %60 {approx = true} : vector<8x1xf32> -> vector<8x1xf32>
    %62 = vector.broadcast %61 : vector<8x1xf32> to vector<8x8xf32>
    %63 = arith.mulf %58, %62 : vector<8x8xf32>
    %64 = arith.truncf %63 : vector<8x8xf32> to vector<8x8xbf16>
    %65 = arith.truncf %46 : vector<8x8xf32> to vector<8x8xbf16>
    %cst_28 = arith.constant dense<0.000000e+00> : vector<8x8xf32>
    %66 = tpu.matmul %64, %65, %cst_28 {dimension_numbers = #tpu.dot_dimension_numbers<[1], [0], [0], [1], [0, 0, 1, 1], [], []>} : vector<8x8xbf16>, vector<8x8xbf16>, vector<8x8xf32> -> vector<8x8xf32>
    %67 = vector.extract_strided_slice %42 {offsets = [0, 0], sizes = [8, 32], strides = [1, 1]} : vector<32x32xbf16> to vector<8x32xbf16>
    %68 = arith.truncf %66 : vector<8x8xf32> to vector<8x8xbf16>
    %cst_29 = arith.constant dense<0.000000e+00> : vector<8x32xf32>
    %69 = tpu.matmul %68, %67, %cst_29 {dimension_numbers = #tpu.dot_dimension_numbers<[1], [0], [0], [1], [0, 0, 1, 1], [], []>} : vector<8x8xbf16>, vector<8x32xbf16>, vector<8x32xf32> -> vector<8x32xf32>
    %70 = arith.addf %43, %69 : vector<8x32xf32>
    %71 = vector.extract_strided_slice %40 {offsets = [0, 8], sizes = [8, 8], strides = [1, 1]} : vector<8x96xf32> to vector<8x8xf32>
    %72 = vector.extract_strided_slice %40 {offsets = [0, 40], sizes = [8, 8], strides = [1, 1]} : vector<8x96xf32> to vector<8x8xf32>
    %73 = vector.extract_strided_slice %40 {offsets = [0, 72], sizes = [8, 8], strides = [1, 1]} : vector<8x96xf32> to vector<8x8xf32>
    %74 = arith.truncf %71 : vector<8x8xf32> to vector<8x8xbf16>
    %75 = arith.truncf %72 : vector<8x8xf32> to vector<8x8xbf16>
    %cst_30 = arith.constant dense<0.000000e+00> : vector<8x8xf32>
    %76 = tpu.matmul %74, %75, %cst_30 {dimension_numbers = #tpu.dot_dimension_numbers<[1], [1], [0], [0], [0, 0, 1, 0], [], []>} : vector<8x8xbf16>, vector<8x8xbf16>, vector<8x8xf32> -> vector<8x8xf32>
    %cst_31 = arith.constant 0.353553385 : f32
    %77 = vector.broadcast %cst_31 : f32 to vector<8x8xf32>
    %78 = arith.mulf %76, %77 : vector<8x8xf32>
    %cst_32 = arith.constant -1.000000e+30 : f32
    %79 = vector.broadcast %cst_32 : f32 to vector<8x8xf32>
    %80 = arith.select %6, %78, %79 : vector<8x8xi1>, vector<8x8xf32>
    %cst_33 = arith.constant dense<0xFF800000> : vector<8xf32>
    %81 = vector.multi_reduction <maximumf>, %80, %cst_33 [1] : vector<8x8xf32> to vector<8xf32>
    %82 = vector.shape_cast %81 : vector<8xf32> to vector<8x1xf32>
    %83 = vector.broadcast %82 : vector<8x1xf32> to vector<8x8xf32>
    %84 = arith.subf %80, %83 : vector<8x8xf32>
    %85 = math.exp %84 : vector<8x8xf32>
    %cst_34 = arith.constant dense<0.000000e+00> : vector<8xf32>
    %86 = vector.multi_reduction <add>, %85, %cst_34 [1] : vector<8x8xf32> to vector<8xf32>
    %87 = vector.shape_cast %86 : vector<8xf32> to vector<8x1xf32>
    %88 = tpu.reciprocal %87 {approx = true} : vector<8x1xf32> -> vector<8x1xf32>
    %89 = vector.broadcast %88 : vector<8x1xf32> to vector<8x8xf32>
    %90 = arith.mulf %85, %89 : vector<8x8xf32>
    %91 = arith.truncf %90 : vector<8x8xf32> to vector<8x8xbf16>
    %92 = arith.truncf %73 : vector<8x8xf32> to vector<8x8xbf16>
    %cst_35 = arith.constant dense<0.000000e+00> : vector<8x8xf32>
    %93 = tpu.matmul %91, %92, %cst_35 {dimension_numbers = #tpu.dot_dimension_numbers<[1], [0], [0], [1], [0, 0, 1, 1], [], []>} : vector<8x8xbf16>, vector<8x8xbf16>, vector<8x8xf32> -> vector<8x8xf32>
    %94 = vector.extract_strided_slice %42 {offsets = [8, 0], sizes = [8, 32], strides = [1, 1]} : vector<32x32xbf16> to vector<8x32xbf16>
    %95 = arith.truncf %93 : vector<8x8xf32> to vector<8x8xbf16>
    %cst_36 = arith.constant dense<0.000000e+00> : vector<8x32xf32>
    %96 = tpu.matmul %95, %94, %cst_36 {dimension_numbers = #tpu.dot_dimension_numbers<[1], [0], [0], [1], [0, 0, 1, 1], [], []>} : vector<8x8xbf16>, vector<8x32xbf16>, vector<8x32xf32> -> vector<8x32xf32>
    %97 = arith.addf %70, %96 : vector<8x32xf32>
    %98 = vector.extract_strided_slice %40 {offsets = [0, 16], sizes = [8, 8], strides = [1, 1]} : vector<8x96xf32> to vector<8x8xf32>
    %99 = vector.extract_strided_slice %40 {offsets = [0, 48], sizes = [8, 8], strides = [1, 1]} : vector<8x96xf32> to vector<8x8xf32>
    %100 = vector.extract_strided_slice %40 {offsets = [0, 80], sizes = [8, 8], strides = [1, 1]} : vector<8x96xf32> to vector<8x8xf32>
    %101 = arith.truncf %98 : vector<8x8xf32> to vector<8x8xbf16>
    %102 = arith.truncf %99 : vector<8x8xf32> to vector<8x8xbf16>
    %cst_37 = arith.constant dense<0.000000e+00> : vector<8x8xf32>
    %103 = tpu.matmul %101, %102, %cst_37 {dimension_numbers = #tpu.dot_dimension_numbers<[1], [1], [0], [0], [0, 0, 1, 0], [], []>} : vector<8x8xbf16>, vector<8x8xbf16>, vector<8x8xf32> -> vector<8x8xf32>
    %cst_38 = arith.constant 0.353553385 : f32
    %104 = vector.broadcast %cst_38 : f32 to vector<8x8xf32>
    %105 = arith.mulf %103, %104 : vector<8x8xf32>
    %cst_39 = arith.constant -1.000000e+30 : f32
    %106 = vector.broadcast %cst_39 : f32 to vector<8x8xf32>
    %107 = arith.select %6, %105, %106 : vector<8x8xi1>, vector<8x8xf32>
    %cst_40 = arith.constant dense<0xFF800000> : vector<8xf32>
    %108 = vector.multi_reduction <maximumf>, %107, %cst_40 [1] : vector<8x8xf32> to vector<8xf32>
    %109 = vector.shape_cast %108 : vector<8xf32> to vector<8x1xf32>
    %110 = vector.broadcast %109 : vector<8x1xf32> to vector<8x8xf32>
    %111 = arith.subf %107, %110 : vector<8x8xf32>
    %112 = math.exp %111 : vector<8x8xf32>
    %cst_41 = arith.constant dense<0.000000e+00> : vector<8xf32>
    %113 = vector.multi_reduction <add>, %112, %cst_41 [1] : vector<8x8xf32> to vector<8xf32>
    %114 = vector.shape_cast %113 : vector<8xf32> to vector<8x1xf32>
    %115 = tpu.reciprocal %114 {approx = true} : vector<8x1xf32> -> vector<8x1xf32>
    %116 = vector.broadcast %115 : vector<8x1xf32> to vector<8x8xf32>
    %117 = arith.mulf %112, %116 : vector<8x8xf32>
    %118 = arith.truncf %117 : vector<8x8xf32> to vector<8x8xbf16>
    %119 = arith.truncf %100 : vector<8x8xf32> to vector<8x8xbf16>
    %cst_42 = arith.constant dense<0.000000e+00> : vector<8x8xf32>
    %120 = tpu.matmul %118, %119, %cst_42 {dimension_numbers = #tpu.dot_dimension_numbers<[1], [0], [0], [1], [0, 0, 1, 1], [], []>} : vector<8x8xbf16>, vector<8x8xbf16>, vector<8x8xf32> -> vector<8x8xf32>
    %121 = vector.extract_strided_slice %42 {offsets = [16, 0], sizes = [8, 32], strides = [1, 1]} : vector<32x32xbf16> to vector<8x32xbf16>
    %122 = arith.truncf %120 : vector<8x8xf32> to vector<8x8xbf16>
    %cst_43 = arith.constant dense<0.000000e+00> : vector<8x32xf32>
    %123 = tpu.matmul %122, %121, %cst_43 {dimension_numbers = #tpu.dot_dimension_numbers<[1], [0], [0], [1], [0, 0, 1, 1], [], []>} : vector<8x8xbf16>, vector<8x32xbf16>, vector<8x32xf32> -> vector<8x32xf32>
    %124 = arith.addf %97, %123 : vector<8x32xf32>
    %125 = vector.extract_strided_slice %40 {offsets = [0, 24], sizes = [8, 8], strides = [1, 1]} : vector<8x96xf32> to vector<8x8xf32>
    %126 = vector.extract_strided_slice %40 {offsets = [0, 56], sizes = [8, 8], strides = [1, 1]} : vector<8x96xf32> to vector<8x8xf32>
    %127 = vector.extract_strided_slice %40 {offsets = [0, 88], sizes = [8, 8], strides = [1, 1]} : vector<8x96xf32> to vector<8x8xf32>
    %128 = arith.truncf %125 : vector<8x8xf32> to vector<8x8xbf16>
    %129 = arith.truncf %126 : vector<8x8xf32> to vector<8x8xbf16>
    %cst_44 = arith.constant dense<0.000000e+00> : vector<8x8xf32>
    %130 = tpu.matmul %128, %129, %cst_44 {dimension_numbers = #tpu.dot_dimension_numbers<[1], [1], [0], [0], [0, 0, 1, 0], [], []>} : vector<8x8xbf16>, vector<8x8xbf16>, vector<8x8xf32> -> vector<8x8xf32>
    %cst_45 = arith.constant 0.353553385 : f32
    %131 = vector.broadcast %cst_45 : f32 to vector<8x8xf32>
    %132 = arith.mulf %130, %131 : vector<8x8xf32>
    %cst_46 = arith.constant -1.000000e+30 : f32
    %133 = vector.broadcast %cst_46 : f32 to vector<8x8xf32>
    %134 = arith.select %6, %132, %133 : vector<8x8xi1>, vector<8x8xf32>
    %cst_47 = arith.constant dense<0xFF800000> : vector<8xf32>
    %135 = vector.multi_reduction <maximumf>, %134, %cst_47 [1] : vector<8x8xf32> to vector<8xf32>
    %136 = vector.shape_cast %135 : vector<8xf32> to vector<8x1xf32>
    %137 = vector.broadcast %136 : vector<8x1xf32> to vector<8x8xf32>
    %138 = arith.subf %134, %137 : vector<8x8xf32>
    %139 = math.exp %138 : vector<8x8xf32>
    %cst_48 = arith.constant dense<0.000000e+00> : vector<8xf32>
    %140 = vector.multi_reduction <add>, %139, %cst_48 [1] : vector<8x8xf32> to vector<8xf32>
    %141 = vector.shape_cast %140 : vector<8xf32> to vector<8x1xf32>
    %142 = tpu.reciprocal %141 {approx = true} : vector<8x1xf32> -> vector<8x1xf32>
    %143 = vector.broadcast %142 : vector<8x1xf32> to vector<8x8xf32>
    %144 = arith.mulf %139, %143 : vector<8x8xf32>
    %145 = arith.truncf %144 : vector<8x8xf32> to vector<8x8xbf16>
    %146 = arith.truncf %127 : vector<8x8xf32> to vector<8x8xbf16>
    %cst_49 = arith.constant dense<0.000000e+00> : vector<8x8xf32>
    %147 = tpu.matmul %145, %146, %cst_49 {dimension_numbers = #tpu.dot_dimension_numbers<[1], [0], [0], [1], [0, 0, 1, 1], [], []>} : vector<8x8xbf16>, vector<8x8xbf16>, vector<8x8xf32> -> vector<8x8xf32>
    %148 = vector.extract_strided_slice %42 {offsets = [24, 0], sizes = [8, 32], strides = [1, 1]} : vector<32x32xbf16> to vector<8x32xbf16>
    %149 = arith.truncf %147 : vector<8x8xf32> to vector<8x8xbf16>
    %cst_50 = arith.constant dense<0.000000e+00> : vector<8x32xf32>
    %150 = tpu.matmul %149, %148, %cst_50 {dimension_numbers = #tpu.dot_dimension_numbers<[1], [0], [0], [1], [0, 0, 1, 1], [], []>} : vector<8x8xbf16>, vector<8x32xbf16>, vector<8x32xf32> -> vector<8x32xf32>
    %151 = arith.addf %124, %150 : vector<8x32xf32>
    %152 = arith.addf %3, %151 : vector<8x32xf32>
    %c0_51 = arith.constant 0 : index
    %c0_52 = arith.constant 0 : index
    %c0_53 = arith.constant 0 : index
    %153 = vector.load %arg8[%c0_51, %c0_52, %c0_53] : memref<1x1x32xf32, #tpu.memory_space<vmem>>, vector<1x1x32xf32>
    %154 = vector.shape_cast %153 : vector<1x1x32xf32> to vector<1x32xf32>
    %155 = vector.broadcast %154 : vector<1x32xf32> to vector<8x32xf32>
    %156 = arith.addf %152, %155 : vector<8x32xf32>
    %c0_54 = arith.constant 0 : index
    %c0_55 = arith.constant 0 : index
    %c0_56 = arith.constant 0 : index
    %157 = vector.load %arg9[%c0_54, %c0_55, %c0_56] : memref<1x1x32xf32, #tpu.memory_space<vmem>>, vector<1x1x32xf32>
    %158 = vector.shape_cast %157 : vector<1x1x32xf32> to vector<1x32xf32>
    %c0_57 = arith.constant 0 : index
    %c0_58 = arith.constant 0 : index
    %c0_59 = arith.constant 0 : index
    %159 = vector.load %arg10[%c0_57, %c0_58, %c0_59] : memref<1x1x32xf32, #tpu.memory_space<vmem>>, vector<1x1x32xf32>
    %160 = vector.shape_cast %159 : vector<1x1x32xf32> to vector<1x32xf32>
    %cst_60 = arith.constant dense<0.000000e+00> : vector<8xf32>
    %161 = vector.multi_reduction <add>, %156, %cst_60 [1] : vector<8x32xf32> to vector<8xf32>
    %162 = vector.shape_cast %161 : vector<8xf32> to vector<8x1xf32>
    %cst_61 = arith.constant 3.200000e+01 : f32
    %163 = vector.broadcast %cst_61 : f32 to vector<8x1xf32>
    %164 = arith.divf %162, %163 : vector<8x1xf32>
    %165 = vector.broadcast %164 : vector<8x1xf32> to vector<8x32xf32>
    %166 = arith.subf %156, %165 : vector<8x32xf32>
    %167 = arith.mulf %166, %166 : vector<8x32xf32>
    %cst_62 = arith.constant dense<0.000000e+00> : vector<8xf32>
    %168 = vector.multi_reduction <add>, %167, %cst_62 [1] : vector<8x32xf32> to vector<8xf32>
    %169 = vector.shape_cast %168 : vector<8xf32> to vector<8x1xf32>
    %cst_63 = arith.constant 3.200000e+01 : f32
    %170 = vector.broadcast %cst_63 : f32 to vector<8x1xf32>
    %171 = arith.divf %169, %170 : vector<8x1xf32>
    %172 = vector.broadcast %164 : vector<8x1xf32> to vector<8x32xf32>
    %173 = arith.subf %156, %172 : vector<8x32xf32>
    %cst_64 = arith.constant 9.99999974E-6 : f32
    %174 = vector.broadcast %cst_64 : f32 to vector<8x1xf32>
    %175 = arith.addf %171, %174 : vector<8x1xf32>
    %176 = math.rsqrt %175 : vector<8x1xf32>
    %177 = vector.broadcast %176 : vector<8x1xf32> to vector<8x32xf32>
    %178 = arith.mulf %173, %177 : vector<8x32xf32>
    %179 = vector.broadcast %158 : vector<1x32xf32> to vector<8x32xf32>
    %180 = arith.mulf %178, %179 : vector<8x32xf32>
    %181 = vector.broadcast %160 : vector<1x32xf32> to vector<8x32xf32>
    %182 = arith.addf %180, %181 : vector<8x32xf32>
    %c0_65 = arith.constant 0 : index
    %c0_66 = arith.constant 0 : index
    %c0_67 = arith.constant 0 : index
    %183 = vector.load %arg11[%c0_65, %c0_66, %c0_67] : memref<1x32x128xbf16, #tpu.memory_space<vmem>>, vector<1x32x128xbf16>
    %184 = vector.shape_cast %183 : vector<1x32x128xbf16> to vector<32x128xbf16>
    %185 = arith.truncf %182 : vector<8x32xf32> to vector<8x32xbf16>
    %cst_68 = arith.constant dense<0.000000e+00> : vector<8x128xf32>
    %186 = tpu.matmul %185, %184, %cst_68 {dimension_numbers = #tpu.dot_dimension_numbers<[1], [0], [0], [1], [0, 0, 1, 1], [], []>} : vector<8x32xbf16>, vector<32x128xbf16>, vector<8x128xf32> -> vector<8x128xf32>
    %c0_69 = arith.constant 0 : index
    %c0_70 = arith.constant 0 : index
    %c0_71 = arith.constant 0 : index
    %187 = vector.load %arg12[%c0_69, %c0_70, %c0_71] : memref<1x1x128xf32, #tpu.memory_space<vmem>>, vector<1x1x128xf32>
    %188 = vector.shape_cast %187 : vector<1x1x128xf32> to vector<1x128xf32>
    %189 = vector.broadcast %188 : vector<1x128xf32> to vector<8x128xf32>
    %190 = arith.addf %186, %189 : vector<8x128xf32>
    %cst_72 = arith.constant 5.000000e-01 : f32
    %191 = vector.broadcast %cst_72 : f32 to vector<8x128xf32>
    %192 = arith.mulf %191, %190 : vector<8x128xf32>
    %cst_73 = arith.constant 4.471500e-02 : f32
    %193 = vector.broadcast %cst_73 : f32 to vector<8x128xf32>
    %194 = arith.mulf %193, %190 : vector<8x128xf32>
    %195 = arith.mulf %194, %190 : vector<8x128xf32>
    %196 = arith.mulf %195, %190 : vector<8x128xf32>
    %197 = arith.addf %190, %196 : vector<8x128xf32>
    %cst_74 = arith.constant 0.797884583 : f32
    %198 = vector.broadcast %cst_74 : f32 to vector<8x128xf32>
    %199 = arith.mulf %198, %197 : vector<8x128xf32>
    %200 = math.tanh %199 : vector<8x128xf32>
    %cst_75 = arith.constant 1.000000e+00 : f32
    %201 = vector.broadcast %cst_75 : f32 to vector<8x128xf32>
    %202 = arith.addf %201, %200 : vector<8x128xf32>
    %203 = arith.mulf %192, %202 : vector<8x128xf32>
    %c0_76 = arith.constant 0 : index
    %c0_77 = arith.constant 0 : index
    %c0_78 = arith.constant 0 : index
    %204 = vector.load %arg13[%c0_76, %c0_77, %c0_78] : memref<1x128x32xbf16, #tpu.memory_space<vmem>>, vector<1x128x32xbf16>
    %205 = vector.shape_cast %204 : vector<1x128x32xbf16> to vector<128x32xbf16>
    %206 = arith.truncf %203 : vector<8x128xf32> to vector<8x128xbf16>
    %cst_79 = arith.constant dense<0.000000e+00> : vector<8x32xf32>
    %207 = tpu.matmul %206, %205, %cst_79 {dimension_numbers = #tpu.dot_dimension_numbers<[1], [0], [0], [1], [0, 0, 1, 1], [], []>} : vector<8x128xbf16>, vector<128x32xbf16>, vector<8x32xf32> -> vector<8x32xf32>
    %208 = arith.addf %156, %207 : vector<8x32xf32>
    %c0_80 = arith.constant 0 : index
    %c0_81 = arith.constant 0 : index
    %c0_82 = arith.constant 0 : index
    %209 = vector.load %arg14[%c0_80, %c0_81, %c0_82] : memref<1x1x32xf32, #tpu.memory_space<vmem>>, vector<1x1x32xf32>
    %210 = vector.shape_cast %209 : vector<1x1x32xf32> to vector<1x32xf32>
    %211 = vector.broadcast %210 : vector<1x32xf32> to vector<8x32xf32>
    %212 = arith.addf %208, %211 : vector<8x32xf32>
    %c0_83 = arith.constant 0 : index
    %c0_84 = arith.constant 0 : index
    %213 = vector.load %arg19[%c0_83, %c0_84] : memref<8x32xf32, #tpu.memory_space<vmem>>, vector<8x32xf32>
    tpu.vector_store %arg19[%c0_83, %c0_84], %212 {strides = array<i32>} : memref<8x32xf32, #tpu.memory_space<vmem>>, vector<8x32xf32>,
    %c1_i32 = arith.constant 1 : i32
    %214 = arith.cmpi eq, %arg1, %c1_i32 : i32
    %215 = arith.extui %214 : i1 to i32
    %c0_i32_85 = arith.constant 0 : i32
    %216 = arith.cmpi ne, %215, %c0_i32_85 : i32
    scf.if %216 {
      %c0_86 = arith.constant 0 : index
      %c0_87 = arith.constant 0 : index
      %217 = vector.load %arg15[%c0_86, %c0_87] : memref<1x32xf32, #tpu.memory_space<vmem>>, vector<1x32xf32>
      %c0_88 = arith.constant 0 : index
      %c0_89 = arith.constant 0 : index
      %218 = vector.load %arg16[%c0_88, %c0_89] : memref<1x32xf32, #tpu.memory_space<vmem>>, vector<1x32xf32>
      %cst_90 = arith.constant dense<0.000000e+00> : vector<8xf32>
      %219 = vector.multi_reduction <add>, %212, %cst_90 [1] : vector<8x32xf32> to vector<8xf32>
      %220 = vector.shape_cast %219 : vector<8xf32> to vector<8x1xf32>
      %cst_91 = arith.constant 3.200000e+01 : f32
      %221 = vector.broadcast %cst_91 : f32 to vector<8x1xf32>
      %222 = arith.divf %220, %221 : vector<8x1xf32>
      %223 = vector.broadcast %222 : vector<8x1xf32> to vector<8x32xf32>
      %224 = arith.subf %212, %223 : vector<8x32xf32>
      %225 = arith.mulf %224, %224 : vector<8x32xf32>
      %cst_92 = arith.constant dense<0.000000e+00> : vector<8xf32>
      %226 = vector.multi_reduction <add>, %225, %cst_92 [1] : vector<8x32xf32> to vector<8xf32>
      %227 = vector.shape_cast %226 : vector<8xf32> to vector<8x1xf32>
      %cst_93 = arith.constant 3.200000e+01 : f32
      %228 = vector.broadcast %cst_93 : f32 to vector<8x1xf32>
      %229 = arith.divf %227, %228 : vector<8x1xf32>
      %230 = vector.broadcast %222 : vector<8x1xf32> to vector<8x32xf32>
      %231 = arith.subf %212, %230 : vector<8x32xf32>
      %cst_94 = arith.constant 9.99999974E-6 : f32
      %232 = vector.broadcast %cst_94 : f32 to vector<8x1xf32>
      %233 = arith.addf %229, %232 : vector<8x1xf32>
      %234 = math.rsqrt %233 : vector<8x1xf32>
      %235 = vector.broadcast %234 : vector<8x1xf32> to vector<8x32xf32>
      %236 = arith.mulf %231, %235 : vector<8x32xf32>
      %237 = vector.broadcast %217 : vector<1x32xf32> to vector<8x32xf32>
      %238 = arith.mulf %236, %237 : vector<8x32xf32>
      %239 = vector.broadcast %218 : vector<1x32xf32> to vector<8x32xf32>
      %240 = arith.addf %238, %239 : vector<8x32xf32>
      %c0_95 = arith.constant 0 : index
      %c0_96 = arith.constant 0 : index
      %241 = vector.load %arg17[%c0_95, %c0_96] : memref<32x128xbf16, #tpu.memory_space<vmem>>, vector<32x128xbf16>
      %242 = arith.truncf %240 : vector<8x32xf32> to vector<8x32xbf16>
      %cst_97 = arith.constant dense<0.000000e+00> : vector<8x128xf32>
      %243 = tpu.matmul %242, %241, %cst_97 {dimension_numbers = #tpu.dot_dimension_numbers<[1], [0], [0], [1], [0, 0, 1, 1], [], []>} : vector<8x32xbf16>, vector<32x128xbf16>, vector<8x128xf32> -> vector<8x128xf32>
      %c0_98 = arith.constant 0 : index
      %c0_99 = arith.constant 0 : index
      %c0_100 = arith.constant 0 : index
      %244 = vector.load %arg18[%c0_98, %c0_99, %c0_100] : memref<1x8x128xf32, #tpu.memory_space<vmem>>, vector<1x8x128xf32>
      %245 = vector.shape_cast %244 : vector<1x8x128xf32> to vector<8x128xf32>
      %246 = vector.shape_cast %243 : vector<8x128xf32> to vector<1x8x128xf32>
      tpu.vector_store %arg18[%c0_98, %c0_99, %c0_100], %246 {strides = array<i32>} : memref<1x8x128xf32, #tpu.memory_space<vmem>>, vector<1x8x128xf32>,
    } else {
    }
    return
  }
  func.func @transform_0(%arg0: i32, %arg1: i32) -> (i32, i32, i32) {
    %c0_i32 = arith.constant 0 : i32
    %c0_i32_0 = arith.constant 0 : i32
    %c0_i32_1 = arith.constant 0 : i32
    return %arg0, %c0_i32, %c0_i32_0 : i32, i32, i32
  }
  func.func @transform_1(%arg0: i32, %arg1: i32) -> (i32, i32, i32) {
    %c0_i32 = arith.constant 0 : i32
    %c0_i32_0 = arith.constant 0 : i32
    %c0_i32_1 = arith.constant 0 : i32
    return %arg1, %c0_i32, %c0_i32_0 : i32, i32, i32
  }
  func.func @transform_2(%arg0: i32, %arg1: i32) -> (i32, i32, i32) {
    %c0_i32 = arith.constant 0 : i32
    %c0_i32_0 = arith.constant 0 : i32
    %c0_i32_1 = arith.constant 0 : i32
    return %arg1, %c0_i32, %c0_i32_0 : i32, i32, i32
  }
  func.func @transform_3(%arg0: i32, %arg1: i32) -> (i32, i32, i32) {
    %c0_i32 = arith.constant 0 : i32
    %c0_i32_0 = arith.constant 0 : i32
    %c0_i32_1 = arith.constant 0 : i32
    return %arg1, %c0_i32, %c0_i32_0 : i32, i32, i32
  }
  func.func @transform_4(%arg0: i32, %arg1: i32) -> (i32, i32, i32) {
    %c0_i32 = arith.constant 0 : i32
    %c0_i32_0 = arith.constant 0 : i32
    %c0_i32_1 = arith.constant 0 : i32
    return %arg1, %c0_i32, %c0_i32_0 : i32, i32, i32
  }
  func.func @transform_5(%arg0: i32, %arg1: i32) -> (i32, i32, i32) {
    %c0_i32 = arith.constant 0 : i32
    %c0_i32_0 = arith.constant 0 : i32
    %c0_i32_1 = arith.constant 0 : i32
    return %arg1, %c0_i32, %c0_i32_0 : i32, i32, i32
  }
  func.func @transform_6(%arg0: i32, %arg1: i32) -> (i32, i32, i32) {
    %c0_i32 = arith.constant 0 : i32
    %c0_i32_0 = arith.constant 0 : i32
    %c0_i32_1 = arith.constant 0 : i32
    return %arg1, %c0_i32, %c0_i32_0 : i32, i32, i32
  }
  func.func @transform_7(%arg0: i32, %arg1: i32) -> (i32, i32, i32) {
    %c0_i32 = arith.constant 0 : i32
    %c0_i32_0 = arith.constant 0 : i32
    %c0_i32_1 = arith.constant 0 : i32
    return %arg1, %c0_i32, %c0_i32_0 : i32, i32, i32
  }
  func.func @transform_8(%arg0: i32, %arg1: i32) -> (i32, i32, i32) {
    %c0_i32 = arith.constant 0 : i32
    %c0_i32_0 = arith.constant 0 : i32
    %c0_i32_1 = arith.constant 0 : i32
    return %arg1, %c0_i32, %c0_i32_0 : i32, i32, i32
  }
  func.func @transform_9(%arg0: i32, %arg1: i32) -> (i32, i32, i32) {
    %c0_i32 = arith.constant 0 : i32
    %c0_i32_0 = arith.constant 0 : i32
    %c0_i32_1 = arith.constant 0 : i32
    return %arg1, %c0_i32, %c0_i32_0 : i32, i32, i32
  }
  func.func @transform_10(%arg0: i32, %arg1: i32) -> (i32, i32, i32) {
    %c0_i32 = arith.constant 0 : i32
    %c0_i32_0 = arith.constant 0 : i32
    %c0_i32_1 = arith.constant 0 : i32
    return %arg1, %c0_i32, %c0_i32_0 : i32, i32, i32
  }
  func.func @transform_11(%arg0: i32, %arg1: i32) -> (i32, i32, i32) {
    %c0_i32 = arith.constant 0 : i32
    %c0_i32_0 = arith.constant 0 : i32
    %c0_i32_1 = arith.constant 0 : i32
    return %arg1, %c0_i32, %c0_i32_0 : i32, i32, i32
  }
  func.func @transform_12(%arg0: i32, %arg1: i32) -> (i32, i32, i32) {
    %c0_i32 = arith.constant 0 : i32
    %c0_i32_0 = arith.constant 0 : i32
    %c0_i32_1 = arith.constant 0 : i32
    return %arg1, %c0_i32, %c0_i32_0 : i32, i32, i32
  }
  func.func @transform_13(%arg0: i32, %arg1: i32) -> (i32, i32) {
    %c0_i32 = arith.constant 0 : i32
    %c0_i32_0 = arith.constant 0 : i32
    %c0_i32_1 = arith.constant 0 : i32
    return %c0_i32, %c0_i32_0 : i32, i32
  }
  func.func @transform_14(%arg0: i32, %arg1: i32) -> (i32, i32) {
    %c0_i32 = arith.constant 0 : i32
    %c0_i32_0 = arith.constant 0 : i32
    %c0_i32_1 = arith.constant 0 : i32
    return %c0_i32, %c0_i32_0 : i32, i32
  }
  func.func @transform_15(%arg0: i32, %arg1: i32) -> (i32, i32) {
    %c0_i32 = arith.constant 0 : i32
    %c0_i32_0 = arith.constant 0 : i32
    %c0_i32_1 = arith.constant 0 : i32
    return %c0_i32, %c0_i32_0 : i32, i32
  }
  func.func @transform_16(%arg0: i32, %arg1: i32) -> (i32, i32, i32) {
    %c0_i32 = arith.constant 0 : i32
    %c0_i32_0 = arith.constant 0 : i32
    %c0_i32_1 = arith.constant 0 : i32
    return %arg0, %c0_i32, %c0_i32_0 : i32, i32, i32
  }
}

</mosaic_0001>

<llo_original>
// kernel: gpt2_forward.1
$region0: #{gpt2_forward.1}
  #allocation0 [shape = 'u32[]', space=smem, size = 0x4, offset = 0x4, fixed_abs, tag = 'smem constant byte address 0x4 - core index']
  #allocation1 [shape = 'u32[72,128]{1,0:T(1,128)}', space=vmem, size = 0x9000, scoped, tag = 'internal scratch']
  #allocation2 [shape = 'f32[8,32]{1,0:T(8,128)}', space=vmem, size = 0x1000, scoped, tag = 'scratch operand']
  %s0 = inlined_call_operand.vmem [shape: f32[2,8,32], index: 0, kind: input, shape index: {}]
  %s1 = inlined_call_operand.vmem [shape: f32[2,1,32], index: 1, kind: input, shape index: {}]
  %s2 = inlined_call_operand.vmem [shape: f32[2,1,32], index: 2, kind: input, shape index: {}]
  %s3 = inlined_call_operand.vmem [shape: bf16[2,32,96], index: 3, kind: input, shape index: {}]
  %s4 = inlined_call_operand.vmem [shape: f32[2,1,96], index: 4, kind: input, shape index: {}]
  %s5 = inlined_call_operand.vmem [shape: bf16[2,32,32], index: 5, kind: input, shape index: {}]
  %s6 = inlined_call_operand.vmem [shape: f32[2,1,32], index: 6, kind: input, shape index: {}]
  %s7 = inlined_call_operand.vmem [shape: f32[2,1,32], index: 7, kind: input, shape index: {}]
  %s8 = inlined_call_operand.vmem [shape: f32[2,1,32], index: 8, kind: input, shape index: {}]
  %s9 = inlined_call_operand.vmem [shape: bf16[2,32,128], index: 9, kind: input, shape index: {}]
  %s10 = inlined_call_operand.vmem [shape: f32[2,1,128], index: 10, kind: input, shape index: {}]
  %s11 = inlined_call_operand.vmem [shape: bf16[2,128,32], index: 11, kind: input, shape index: {}]
  %s12 = inlined_call_operand.vmem [shape: f32[2,1,32], index: 12, kind: input, shape index: {}]
  %s13 = inlined_call_operand.vmem [shape: f32[1,32], index: 13, kind: input, shape index: {}]
  %s14 = inlined_call_operand.vmem [shape: f32[1,32], index: 14, kind: input, shape index: {}]
  %s15 = inlined_call_operand.vmem [shape: bf16[32,128], index: 15, kind: input, shape index: {}]
  %s16 = inlined_call_operand.hbm [shape: f32[2,8,128], index: 16, kind: output, shape index: {}]
  %s17 = sld [smem:[#allocation0]]
  $region105: #{gpt2_forward.1} parent=0
    _
  %s19 = ssub.s32 1, %s17
  %s20 = scalar_select 0, %s19, %s17
  $region1: #{gpt2_forward.1} parent=0
    #allocation3 [shape = 'u8[8192]{0}', space=vmem, size = 0x2000, scoped, tag = 'output window, operand 0']
    #allocation4 [shape = 's32[2]{0}', space=sflag, size = 0x8, scoped, tag = 'scoped memory for gpt2_forward.1']
    %21 = vsyncpa [#allocation4], 0
    %s22 = scalar_lea.sflag [#allocation4], 1
    %23 = vsyncpa %s22, 0
    loop: start=0, step=1, limit=6
    $region2: #{gpt2_forward.1} parent=1 // loop_pre_header
      _
    $region3: #{gpt2_forward.1} parent=1 // loop_header
      %s25 = sphi 0, %s29
      %p26 = scmp.ge.s32.totalorder %s25, 6
      %s32 = sphi 0, %s44
      %s33 = sphi 0, %s40
      %s34 = sphi 0, %s32
      %s35 = sphi 0, %s33
      %s36 = sphi 0, %s34
      %s37 = sphi 0, %s35
      %s47 = sphi 0, %s49
      %s50 = sphi 0, %s47
      %s51 = sphi 0, %s50
      %s67 = sphi 0, %s51
      %s73 = sphi 0, %s75
      %s76 = sphi 0, %s73
      %s77 = sphi 0, %s76
      %s93 = sphi 0, %s77
      %s99 = sphi 0, %s101
      %s102 = sphi 0, %s99
      %s103 = sphi 0, %s102
      %s119 = sphi 0, %s103
      %s125 = sphi 0, %s127
      %s128 = sphi 0, %s125
      %s129 = sphi 0, %s128
      %s145 = sphi 0, %s129
      %s151 = sphi 0, %s153
      %s154 = sphi 0, %s151
      %s155 = sphi 0, %s154
      %s171 = sphi 0, %s155
      %s177 = sphi 0, %s179
      %s180 = sphi 0, %s177
      %s181 = sphi 0, %s180
      %s197 = sphi 0, %s181
      %s203 = sphi 0, %s205
      %s206 = sphi 0, %s203
      %s207 = sphi 0, %s206
      %s223 = sphi 0, %s207
      %s229 = sphi 0, %s231
      %s232 = sphi 0, %s229
      %s233 = sphi 0, %s232
      %s249 = sphi 0, %s233
      %s255 = sphi 0, %s257
      %s258 = sphi 0, %s255
      %s259 = sphi 0, %s258
      %s275 = sphi 0, %s259
      %s281 = sphi 0, %s283
      %s284 = sphi 0, %s281
      %s285 = sphi 0, %s284
      %s301 = sphi 0, %s285
      %s307 = sphi 0, %s309
      %s310 = sphi 0, %s307
      %s311 = sphi 0, %s310
      %s327 = sphi 0, %s311
      %s333 = sphi 0, %s335
      %s336 = sphi 0, %s333
      %s337 = sphi 0, %s336
      %s353 = sphi 0, %s337
      %s359 = sphi 0, %s361
      %s362 = sphi 0, %s359
      %s363 = sphi 0, %s362
      %s379 = sphi 0, %s363
      %s383 = sphi 0, %s383
      %s385 = sphi 0, %s383
      %s386 = sphi 0, %s385
      %s400 = sphi 0, %s386
      %s404 = sphi 0, %s404
      %s406 = sphi 0, %s404
      %s407 = sphi 0, %s406
      %s421 = sphi 0, %s407
      %s425 = sphi 0, %s425
      %s427 = sphi 0, %s425
      %s428 = sphi 0, %s427
      %s442 = sphi 0, %s428
      %s448 = sphi 0, %s450
      %s451 = sphi 0, %s448
      %s452 = sphi 0, %s451
      %s468 = sphi 0, %s452
    $region4: #{gpt2_forward.1} parent=1 // loop_header_branch
      %28 = sbr.rel (%p26) target = $region8
    $region5: #{gpt2_forward.1} parent=1 // loop_body
      %s30 = ssub.s32 %s25, 1
      %s31 = ssub.s32 %s25, 2
      %s38 = sadd.s32 1, %s33
      %p39 = scmp.ge.s32.totalorder %s38, 2
      %s40 = scalar_select %p39, 0, %s38
      %s41 = sadd.s32 1, %s32
      %s42 = scalar_select %p39, %s41, %s32
      %p43 = scmp.ge.s32.totalorder %s42, 2
      %s44 = scalar_select %p43, 0, %s42
      %s45 = ssub.s32 %s32, %s44
      %p46 = scmp.eq.s32.totalorder %s45, 0
      %s48 = sadd.s32 %s47, 1
      %s49 = scalar_select %p46, %s47, %s48
      %p52 = pneg %p46
      %p53 = scmp.eq.s32.totalorder %s25, 3
      %p54 = por %p52, %p53
      %p55 = scmp.ne.s32.totalorder %s47, %s50
      %p56 = scmp.eq.s32.totalorder %s25, 0
      %p57 = por %p55, %p56
      %p58 = scmp.ne.s32.totalorder %s47, %s50
      %p59 = scmp.eq.s32.totalorder %s30, 3
      %p60 = por %p58, %p59
      %p61 = scmp.ne.s32.totalorder %s50, %s51
      %p62 = scmp.eq.s32.totalorder %s30, 0
      %p63 = por %p61, %p62
      %p64 = scmp.ne.s32.totalorder %s50, %s51
      %p65 = scmp.eq.s32.totalorder %s31, 3
      %p66 = por %p64, %p65
      %p68 = scmp.ne.s32.totalorder %s51, %s67
      %p69 = scmp.eq.s32.totalorder %s31, 0
      %p70 = por %p68, %p69
      %s71 = ssub.s32 %s33, %s40
      %p72 = scmp.eq.s32.totalorder %s71, 0
      %s74 = sadd.s32 %s73, 1
      %s75 = scalar_select %p72, %s73, %s74
      %p78 = pneg %p72
      %p79 = scmp.eq.s32.totalorder %s25, 3
      %p80 = por %p78, %p79
      %p81 = scmp.ne.s32.totalorder %s73, %s76
      %p82 = scmp.eq.s32.totalorder %s25, 0
      %p83 = por %p81, %p82
      %p84 = scmp.ne.s32.totalorder %s73, %s76
      %p85 = scmp.eq.s32.totalorder %s30, 3
      %p86 = por %p84, %p85
      %p87 = scmp.ne.s32.totalorder %s76, %s77
      %p88 = scmp.eq.s32.totalorder %s30, 0
      %p89 = por %p87, %p88
      %p90 = scmp.ne.s32.totalorder %s76, %s77
      %p91 = scmp.eq.s32.totalorder %s31, 3
      %p92 = por %p90, %p91
      %p94 = scmp.ne.s32.totalorder %s77, %s93
      %p95 = scmp.eq.s32.totalorder %s31, 0
      %p96 = por %p94, %p95
      %s97 = ssub.s32 %s33, %s40
      %p98 = scmp.eq.s32.totalorder %s97, 0
      %s100 = sadd.s32 %s99, 1
      %s101 = scalar_select %p98, %s99, %s100
      %p104 = pneg %p98
      %p105 = scmp.eq.s32.totalorder %s25, 3
      %p106 = por %p104, %p105
      %p107 = scmp.ne.s32.totalorder %s99, %s102
      %p108 = scmp.eq.s32.totalorder %s25, 0
      %p109 = por %p107, %p108
      %p110 = scmp.ne.s32.totalorder %s99, %s102
      %p111 = scmp.eq.s32.totalorder %s30, 3
      %p112 = por %p110, %p111
      %p113 = scmp.ne.s32.totalorder %s102, %s103
      %p114 = scmp.eq.s32.totalorder %s30, 0
      %p115 = por %p113, %p114
      %p116 = scmp.ne.s32.totalorder %s102, %s103
      %p117 = scmp.eq.s32.totalorder %s31, 3
      %p118 = por %p116, %p117
      %p120 = scmp.ne.s32.totalorder %s103, %s119
      %p121 = scmp.eq.s32.totalorder %s31, 0
      %p122 = por %p120, %p121
      %s123 = ssub.s32 %s33, %s40
      %p124 = scmp.eq.s32.totalorder %s123, 0
      %s126 = sadd.s32 %s125, 1
      %s127 = scalar_select %p124, %s125, %s126
      %p130 = pneg %p124
      %p131 = scmp.eq.s32.totalorder %s25, 3
      %p132 = por %p130, %p131
      %p133 = scmp.ne.s32.totalorder %s125, %s128
      %p134 = scmp.eq.s32.totalorder %s25, 0
      %p135 = por %p133, %p134
      %p136 = scmp.ne.s32.totalorder %s125, %s128
      %p137 = scmp.eq.s32.totalorder %s30, 3
      %p138 = por %p136, %p137
      %p139 = scmp.ne.s32.totalorder %s128, %s129
      %p140 = scmp.eq.s32.totalorder %s30, 0
      %p141 = por %p139, %p140
      %p142 = scmp.ne.s32.totalorder %s128, %s129
      %p143 = scmp.eq.s32.totalorder %s31, 3
      %p144 = por %p142, %p143
      %p146 = scmp.ne.s32.totalorder %s129, %s145
      %p147 = scmp.eq.s32.totalorder %s31, 0
      %p148 = por %p146, %p147
      %s149 = ssub.s32 %s33, %s40
      %p150 = scmp.eq.s32.totalorder %s149, 0
      %s152 = sadd.s32 %s151, 1
      %s153 = scalar_select %p150, %s151, %s152
      %p156 = pneg %p150
      %p157 = scmp.eq.s32.totalorder %s25, 3
      %p158 = por %p156, %p157
      %p159 = scmp.ne.s32.totalorder %s151, %s154
      %p160 = scmp.eq.s32.totalorder %s25, 0
      %p161 = por %p159, %p160
      %p162 = scmp.ne.s32.totalorder %s151, %s154
      %p163 = scmp.eq.s32.totalorder %s30, 3
      %p164 = por %p162, %p163
      %p165 = scmp.ne.s32.totalorder %s154, %s155
      %p166 = scmp.eq.s32.totalorder %s30, 0
      %p167 = por %p165, %p166
      %p168 = scmp.ne.s32.totalorder %s154, %s155
      %p169 = scmp.eq.s32.totalorder %s31, 3
      %p170 = por %p168, %p169
      %p172 = scmp.ne.s32.totalorder %s155, %s171
      %p173 = scmp.eq.s32.totalorder %s31, 0
      %p174 = por %p172, %p173
      %s175 = ssub.s32 %s33, %s40
      %p176 = scmp.eq.s32.totalorder %s175, 0
      %s178 = sadd.s32 %s177, 1
      %s179 = scalar_select %p176, %s177, %s178
      %p182 = pneg %p176
      %p183 = scmp.eq.s32.totalorder %s25, 3
      %p184 = por %p182, %p183
      %p185 = scmp.ne.s32.totalorder %s177, %s180
      %p186 = scmp.eq.s32.totalorder %s25, 0
      %p187 = por %p185, %p186
      %p188 = scmp.ne.s32.totalorder %s177, %s180
      %p189 = scmp.eq.s32.totalorder %s30, 3
      %p190 = por %p188, %p189
      %p191 = scmp.ne.s32.totalorder %s180, %s181
      %p192 = scmp.eq.s32.totalorder %s30, 0
      %p193 = por %p191, %p192
      %p194 = scmp.ne.s32.totalorder %s180, %s181
      %p195 = scmp.eq.s32.totalorder %s31, 3
      %p196 = por %p194, %p195
      %p198 = scmp.ne.s32.totalorder %s181, %s197
      %p199 = scmp.eq.s32.totalorder %s31, 0
      %p200 = por %p198, %p199
      %s201 = ssub.s32 %s33, %s40
      %p202 = scmp.eq.s32.totalorder %s201, 0
      %s204 = sadd.s32 %s203, 1
      %s205 = scalar_select %p202, %s203, %s204
      %p208 = pneg %p202
      %p209 = scmp.eq.s32.totalorder %s25, 3
      %p210 = por %p208, %p209
      %p211 = scmp.ne.s32.totalorder %s203, %s206
      %p212 = scmp.eq.s32.totalorder %s25, 0
      %p213 = por %p211, %p212
      %p214 = scmp.ne.s32.totalorder %s203, %s206
      %p215 = scmp.eq.s32.totalorder %s30, 3
      %p216 = por %p214, %p215
      %p217 = scmp.ne.s32.totalorder %s206, %s207
      %p218 = scmp.eq.s32.totalorder %s30, 0
      %p219 = por %p217, %p218
      %p220 = scmp.ne.s32.totalorder %s206, %s207
      %p221 = scmp.eq.s32.totalorder %s31, 3
      %p222 = por %p220, %p221
      %p224 = scmp.ne.s32.totalorder %s207, %s223
      %p225 = scmp.eq.s32.totalorder %s31, 0
      %p226 = por %p224, %p225
      %s227 = ssub.s32 %s33, %s40
      %p228 = scmp.eq.s32.totalorder %s227, 0
      %s230 = sadd.s32 %s229, 1
      %s231 = scalar_select %p228, %s229, %s230
      %p234 = pneg %p228
      %p235 = scmp.eq.s32.totalorder %s25, 3
      %p236 = por %p234, %p235
      %p237 = scmp.ne.s32.totalorder %s229, %s232
      %p238 = scmp.eq.s32.totalorder %s25, 0
      %p239 = por %p237, %p238
      %p240 = scmp.ne.s32.totalorder %s229, %s232
      %p241 = scmp.eq.s32.totalorder %s30, 3
      %p242 = por %p240, %p241
      %p243 = scmp.ne.s32.totalorder %s232, %s233
      %p244 = scmp.eq.s32.totalorder %s30, 0
      %p245 = por %p243, %p244
      %p246 = scmp.ne.s32.totalorder %s232, %s233
      %p247 = scmp.eq.s32.totalorder %s31, 3
      %p248 = por %p246, %p247
      %p250 = scmp.ne.s32.totalorder %s233, %s249
      %p251 = scmp.eq.s32.totalorder %s31, 0
      %p252 = por %p250, %p251
      %s253 = ssub.s32 %s33, %s40
      %p254 = scmp.eq.s32.totalorder %s253, 0
      %s256 = sadd.s32 %s255, 1
      %s257 = scalar_select %p254, %s255, %s256
      %p260 = pneg %p254
      %p261 = scmp.eq.s32.totalorder %s25, 3
      %p262 = por %p260, %p261
      %p263 = scmp.ne.s32.totalorder %s255, %s258
      %p264 = scmp.eq.s32.totalorder %s25, 0
      %p265 = por %p263, %p264
      %p266 = scmp.ne.s32.totalorder %s255, %s258
      %p267 = scmp.eq.s32.totalorder %s30, 3
      %p268 = por %p266, %p267
      %p269 = scmp.ne.s32.totalorder %s258, %s259
      %p270 = scmp.eq.s32.totalorder %s30, 0
      %p271 = por %p269, %p270
      %p272 = scmp.ne.s32.totalorder %s258, %s259
      %p273 = scmp.eq.s32.totalorder %s31, 3
      %p274 = por %p272, %p273
      %p276 = scmp.ne.s32.totalorder %s259, %s275
      %p277 = scmp.eq.s32.totalorder %s31, 0
      %p278 = por %p276, %p277
      %s279 = ssub.s32 %s33, %s40
      %p280 = scmp.eq.s32.totalorder %s279, 0
      %s282 = sadd.s32 %s281, 1
      %s283 = scalar_select %p280, %s281, %s282
      %p286 = pneg %p280
      %p287 = scmp.eq.s32.totalorder %s25, 3
      %p288 = por %p286, %p287
      %p289 = scmp.ne.s32.totalorder %s281, %s284
      %p290 = scmp.eq.s32.totalorder %s25, 0
      %p291 = por %p289, %p290
      %p292 = scmp.ne.s32.totalorder %s281, %s284
      %p293 = scmp.eq.s32.totalorder %s30, 3
      %p294 = por %p292, %p293
      %p295 = scmp.ne.s32.totalorder %s284, %s285
      %p296 = scmp.eq.s32.totalorder %s30, 0
      %p297 = por %p295, %p296
      %p298 = scmp.ne.s32.totalorder %s284, %s285
      %p299 = scmp.eq.s32.totalorder %s31, 3
      %p300 = por %p298, %p299
      %p302 = scmp.ne.s32.totalorder %s285, %s301
      %p303 = scmp.eq.s32.totalorder %s31, 0
      %p304 = por %p302, %p303
      %s305 = ssub.s32 %s33, %s40
      %p306 = scmp.eq.s32.totalorder %s305, 0
      %s308 = sadd.s32 %s307, 1
      %s309 = scalar_select %p306, %s307, %s308
      %p312 = pneg %p306
      %p313 = scmp.eq.s32.totalorder %s25, 3
      %p314 = por %p312, %p313
      %p315 = scmp.ne.s32.totalorder %s307, %s310
      %p316 = scmp.eq.s32.totalorder %s25, 0
      %p317 = por %p315, %p316
      %p318 = scmp.ne.s32.totalorder %s307, %s310
      %p319 = scmp.eq.s32.totalorder %s30, 3
      %p320 = por %p318, %p319
      %p321 = scmp.ne.s32.totalorder %s310, %s311
      %p322 = scmp.eq.s32.totalorder %s30, 0
      %p323 = por %p321, %p322
      %p324 = scmp.ne.s32.totalorder %s310, %s311
      %p325 = scmp.eq.s32.totalorder %s31, 3
      %p326 = por %p324, %p325
      %p328 = scmp.ne.s32.totalorder %s311, %s327
      %p329 = scmp.eq.s32.totalorder %s31, 0
      %p330 = por %p328, %p329
      %s331 = ssub.s32 %s33, %s40
      %p332 = scmp.eq.s32.totalorder %s331, 0
      %s334 = sadd.s32 %s333, 1
      %s335 = scalar_select %p332, %s333, %s334
      %p338 = pneg %p332
      %p339 = scmp.eq.s32.totalorder %s25, 3
      %p340 = por %p338, %p339
      %p341 = scmp.ne.s32.totalorder %s333, %s336
      %p342 = scmp.eq.s32.totalorder %s25, 0
      %p343 = por %p341, %p342
      %p344 = scmp.ne.s32.totalorder %s333, %s336
      %p345 = scmp.eq.s32.totalorder %s30, 3
      %p346 = por %p344, %p345
      %p347 = scmp.ne.s32.totalorder %s336, %s337
      %p348 = scmp.eq.s32.totalorder %s30, 0
      %p349 = por %p347, %p348
      %p350 = scmp.ne.s32.totalorder %s336, %s337
      %p351 = scmp.eq.s32.totalorder %s31, 3
      %p352 = por %p350, %p351
      %p354 = scmp.ne.s32.totalorder %s337, %s353
      %p355 = scmp.eq.s32.totalorder %s31, 0
      %p356 = por %p354, %p355
      %s357 = ssub.s32 %s33, %s40
      %p358 = scmp.eq.s32.totalorder %s357, 0
      %s360 = sadd.s32 %s359, 1
      %s361 = scalar_select %p358, %s359, %s360
      %p364 = pneg %p358
      %p365 = scmp.eq.s32.totalorder %s25, 3
      %p366 = por %p364, %p365
      %p367 = scmp.ne.s32.totalorder %s359, %s362
      %p368 = scmp.eq.s32.totalorder %s25, 0
      %p369 = por %p367, %p368
      %p370 = scmp.ne.s32.totalorder %s359, %s362
      %p371 = scmp.eq.s32.totalorder %s30, 3
      %p372 = por %p370, %p371
      %p373 = scmp.ne.s32.totalorder %s362, %s363
      %p374 = scmp.eq.s32.totalorder %s30, 0
      %p375 = por %p373, %p374
      %p376 = scmp.ne.s32.totalorder %s362, %s363
      %p377 = scmp.eq.s32.totalorder %s31, 3
      %p378 = por %p376, %p377
      %p380 = scmp.ne.s32.totalorder %s363, %s379
      %p381 = scmp.eq.s32.totalorder %s31, 0
      %p382 = por %p380, %p381
      %s384 = sadd.s32 %s383, 1
      %p387 = scmp.eq.s32.totalorder %s25, 3
      %p388 = scmp.ne.s32.totalorder %s383, %s385
      %p389 = scmp.eq.s32.totalorder %s25, 0
      %p390 = por %p388, %p389
      %p391 = scmp.ne.s32.totalorder %s383, %s385
      %p392 = scmp.eq.s32.totalorder %s30, 3
      %p393 = por %p391, %p392
      %p394 = scmp.ne.s32.totalorder %s385, %s386
      %p395 = scmp.eq.s32.totalorder %s30, 0
      %p396 = por %p394, %p395
      %p397 = scmp.ne.s32.totalorder %s385, %s386
      %p398 = scmp.eq.s32.totalorder %s31, 3
      %p399 = por %p397, %p398
      %p401 = scmp.ne.s32.totalorder %s386, %s400
      %p402 = scmp.eq.s32.totalorder %s31, 0
      %p403 = por %p401, %p402
      %s405 = sadd.s32 %s404, 1
      %p408 = scmp.eq.s32.totalorder %s25, 3
      %p409 = scmp.ne.s32.totalorder %s404, %s406
      %p410 = scmp.eq.s32.totalorder %s25, 0
      %p411 = por %p409, %p410
      %p412 = scmp.ne.s32.totalorder %s404, %s406
      %p413 = scmp.eq.s32.totalorder %s30, 3
      %p414 = por %p412, %p413
      %p415 = scmp.ne.s32.totalorder %s406, %s407
      %p416 = scmp.eq.s32.totalorder %s30, 0
      %p417 = por %p415, %p416
      %p418 = scmp.ne.s32.totalorder %s406, %s407
      %p419 = scmp.eq.s32.totalorder %s31, 3
      %p420 = por %p418, %p419
      %p422 = scmp.ne.s32.totalorder %s407, %s421
      %p423 = scmp.eq.s32.totalorder %s31, 0
      %p424 = por %p422, %p423
      %s426 = sadd.s32 %s425, 1
      %p429 = scmp.eq.s32.totalorder %s25, 3
      %p430 = scmp.ne.s32.totalorder %s425, %s427
      %p431 = scmp.eq.s32.totalorder %s25, 0
      %p432 = por %p430, %p431
      %p433 = scmp.ne.s32.totalorder %s425, %s427
      %p434 = scmp.eq.s32.totalorder %s30, 3
      %p435 = por %p433, %p434
      %p436 = scmp.ne.s32.totalorder %s427, %s428
      %p437 = scmp.eq.s32.totalorder %s30, 0
      %p438 = por %p436, %p437
      %p439 = scmp.ne.s32.totalorder %s427, %s428
      %p440 = scmp.eq.s32.totalorder %s31, 3
      %p441 = por %p439, %p440
      %p443 = scmp.ne.s32.totalorder %s428, %s442
      %p444 = scmp.eq.s32.totalorder %s31, 0
      %p445 = por %p443, %p444
      %s446 = ssub.s32 %s32, %s44
      %p447 = scmp.eq.s32.totalorder %s446, 0
      %s449 = sadd.s32 %s448, 1
      %s450 = scalar_select %p447, %s448, %s449
      %p453 = pneg %p447
      %p454 = scmp.eq.s32.totalorder %s25, 3
      %p455 = por %p453, %p454
      %p456 = scmp.ne.s32.totalorder %s448, %s451
      %p457 = scmp.eq.s32.totalorder %s25, 0
      %p458 = por %p456, %p457
      %p459 = scmp.ne.s32.totalorder %s448, %s451
      %p460 = scmp.eq.s32.totalorder %s30, 3
      %p461 = por %p459, %p460
      %p462 = scmp.ne.s32.totalorder %s451, %s452
      %p463 = scmp.eq.s32.totalorder %s30, 0
      %p464 = por %p462, %p463
      %p465 = scmp.ne.s32.totalorder %s451, %s452
      %p466 = scmp.eq.s32.totalorder %s31, 3
      %p467 = por %p465, %p466
      %p469 = scmp.ne.s32.totalorder %s452, %s468
      %p470 = scmp.eq.s32.totalorder %s31, 0
      %p471 = por %p469, %p470
      %p472 = scmp.le.s32.totalorder 1, %s25
      %p473 = scmp.lt.s32.totalorder %s25, 5
      %p474 = pnand %p472, %p473
      %p475 = pneg %p474
      // Predicated region
      $region9: #{gpt2_forward.1} parent=5 // pred_check
        _
      $region10: #{gpt2_forward.1} parent=5 // pred_check_branch
        %477 = sbr.rel (%p474) target = $region12
      $region11: #{gpt2_forward.1} parent=5 // pred_region
        %s478 = ssub.s32 %s25, 1
        // Predicated region
        $region13: #{gpt2_forward.1} parent=11 // pred_check
          %p479 = pneg %p396
        $region14: #{gpt2_forward.1} parent=11 // pred_check_branch
          %481 = sbr.rel (%p479) target = $region16
        $region15: #{gpt2_forward.1} parent=11 // pred_region
          _
        $region16: #{gpt2_forward.1} parent=11 // pred_fallthru
          _
        // Predicated region
        $region17: #{gpt2_forward.1} parent=11 // pred_check
          %p482 = pneg %p417
        $region18: #{gpt2_forward.1} parent=11 // pred_check_branch
          %484 = sbr.rel (%p482) target = $region20
        $region19: #{gpt2_forward.1} parent=11 // pred_region
          _
        $region20: #{gpt2_forward.1} parent=11 // pred_fallthru
          _
        // Predicated region
        $region21: #{gpt2_forward.1} parent=11 // pred_check
          %p485 = pneg %p438
        $region22: #{gpt2_forward.1} parent=11 // pred_check_branch
          %487 = sbr.rel (%p485) target = $region24
        $region23: #{gpt2_forward.1} parent=11 // pred_region
          _
        $region24: #{gpt2_forward.1} parent=11 // pred_fallthru
          _
      $region12: #{gpt2_forward.1} parent=5 // pred_fallthru
        _
      %p488 = scmp.lt.s32.totalorder %s25, 4
      // Predicated region
      $region25: #{gpt2_forward.1} parent=5 // pred_check
        %p489 = pneg %p488
      $region26: #{gpt2_forward.1} parent=5 // pred_check_branch
        %491 = sbr.rel (%p489) target = $region28
      $region27: #{gpt2_forward.1} parent=5 // pred_region
        // Predicated region
        $region29: #{gpt2_forward.1} parent=27 // pred_check
          %p492 = pneg %p57
        $region30: #{gpt2_forward.1} parent=27 // pred_check_branch
          %494 = sbr.rel (%p492) target = $region32
        $region31: #{gpt2_forward.1} parent=27 // pred_region
          %p495 = scmp.lt.s32.totalorder %s32, 1
          %s496 = scalar_select %p495, %s32, 1
          %s497 = smul.addr %s496, 8
          %s498 = scalar_lea.vmem %s0, %s497
        $region32: #{gpt2_forward.1} parent=27 // pred_fallthru
          _
        // Predicated region
        $region33: #{gpt2_forward.1} parent=27 // pred_check
          %p499 = pneg %p83
        $region34: #{gpt2_forward.1} parent=27 // pred_check_branch
          %501 = sbr.rel (%p499) target = $region36
        $region35: #{gpt2_forward.1} parent=27 // pred_region
          %p502 = scmp.lt.s32.totalorder %s33, 1
          %s503 = scalar_select %p502, %s33, 1
          %s504 = scalar_lea.vmem %s1, %s503
        $region36: #{gpt2_forward.1} parent=27 // pred_fallthru
          _
        // Predicated region
        $region37: #{gpt2_forward.1} parent=27 // pred_check
          %p505 = pneg %p109
        $region38: #{gpt2_forward.1} parent=27 // pred_check_branch
          %507 = sbr.rel (%p505) target = $region40
        $region39: #{gpt2_forward.1} parent=27 // pred_region
          %p508 = scmp.lt.s32.totalorder %s33, 1
          %s509 = scalar_select %p508, %s33, 1
          %s510 = scalar_lea.vmem %s2, %s509
        $region40: #{gpt2_forward.1} parent=27 // pred_fallthru
          _
        // Predicated region
        $region41: #{gpt2_forward.1} parent=27 // pred_check
          %p511 = pneg %p135
        $region42: #{gpt2_forward.1} parent=27 // pred_check_branch
          %513 = sbr.rel (%p511) target = $region44
        $region43: #{gpt2_forward.1} parent=27 // pred_region
          %p514 = scmp.lt.s32.totalorder %s33, 1
          %s515 = scalar_select %p514, %s33, 1
          %s516 = smul.addr %s515, 4
          %s517 = smul.addr %s516, 4
          %s518 = scalar_lea.vmem %s3, %s517
        $region44: #{gpt2_forward.1} parent=27 // pred_fallthru
          _
        // Predicated region
        $region45: #{gpt2_forward.1} parent=27 // pred_check
          %p519 = pneg %p161
        $region46: #{gpt2_forward.1} parent=27 // pred_check_branch
          %521 = sbr.rel (%p519) target = $region48
        $region47: #{gpt2_forward.1} parent=27 // pred_region
          %p522 = scmp.lt.s32.totalorder %s33, 1
          %s523 = scalar_select %p522, %s33, 1
          %s524 = scalar_lea.vmem %s4, %s523
        $region48: #{gpt2_forward.1} parent=27 // pred_fallthru
          _
        // Predicated region
        $region49: #{gpt2_forward.1} parent=27 // pred_check
          %p525 = pneg %p187
        $region50: #{gpt2_forward.1} parent=27 // pred_check_branch
          %527 = sbr.rel (%p525) target = $region52
        $region51: #{gpt2_forward.1} parent=27 // pred_region
          %p528 = scmp.lt.s32.totalorder %s33, 1
          %s529 = scalar_select %p528, %s33, 1
          %s530 = smul.addr %s529, 4
          %s531 = smul.addr %s530, 4
          %s532 = scalar_lea.vmem %s5, %s531
        $region52: #{gpt2_forward.1} parent=27 // pred_fallthru
          _
        // Predicated region
        $region53: #{gpt2_forward.1} parent=27 // pred_check
          %p533 = pneg %p213
        $region54: #{gpt2_forward.1} parent=27 // pred_check_branch
          %535 = sbr.rel (%p533) target = $region56
        $region55: #{gpt2_forward.1} parent=27 // pred_region
          %p536 = scmp.lt.s32.totalorder %s33, 1
          %s537 = scalar_select %p536, %s33, 1
          %s538 = scalar_lea.vmem %s6, %s537
        $region56: #{gpt2_forward.1} parent=27 // pred_fallthru
          _
        // Predicated region
        $region57: #{gpt2_forward.1} parent=27 // pred_check
          %p539 = pneg %p239
        $region58: #{gpt2_forward.1} parent=27 // pred_check_branch
          %541 = sbr.rel (%p539) target = $region60
        $region59: #{gpt2_forward.1} parent=27 // pred_region
          %p542 = scmp.lt.s32.totalorder %s33, 1
          %s543 = scalar_select %p542, %s33, 1
          %s544 = scalar_lea.vmem %s7, %s543
        $region60: #{gpt2_forward.1} parent=27 // pred_fallthru
          _
        // Predicated region
        $region61: #{gpt2_forward.1} parent=27 // pred_check
          %p545 = pneg %p265
        $region62: #{gpt2_forward.1} parent=27 // pred_check_branch
          %547 = sbr.rel (%p545) target = $region64
        $region63: #{gpt2_forward.1} parent=27 // pred_region
          %p548 = scmp.lt.s32.totalorder %s33, 1
          %s549 = scalar_select %p548, %s33, 1
          %s550 = scalar_lea.vmem %s8, %s549
        $region64: #{gpt2_forward.1} parent=27 // pred_fallthru
          _
        // Predicated region
        $region65: #{gpt2_forward.1} parent=27 // pred_check
          %p551 = pneg %p291
        $region66: #{gpt2_forward.1} parent=27 // pred_check_branch
          %553 = sbr.rel (%p551) target = $region68
        $region67: #{gpt2_forward.1} parent=27 // pred_region
          %p554 = scmp.lt.s32.totalorder %s33, 1
          %s555 = scalar_select %p554, %s33, 1
          %s556 = smul.addr %s555, 4
          %s557 = smul.addr %s556, 4
          %s558 = scalar_lea.vmem %s9, %s557
        $region68: #{gpt2_forward.1} parent=27 // pred_fallthru
          _
        // Predicated region
        $region69: #{gpt2_forward.1} parent=27 // pred_check
          %p559 = pneg %p317
        $region70: #{gpt2_forward.1} parent=27 // pred_check_branch
          %561 = sbr.rel (%p559) target = $region72
        $region71: #{gpt2_forward.1} parent=27 // pred_region
          %p562 = scmp.lt.s32.totalorder %s33, 1
          %s563 = scalar_select %p562, %s33, 1
          %s564 = scalar_lea.vmem %s10, %s563
        $region72: #{gpt2_forward.1} parent=27 // pred_fallthru
          _
        // Predicated region
        $region73: #{gpt2_forward.1} parent=27 // pred_check
          %p565 = pneg %p343
        $region74: #{gpt2_forward.1} parent=27 // pred_check_branch
          %567 = sbr.rel (%p565) target = $region76
        $region75: #{gpt2_forward.1} parent=27 // pred_region
          %p568 = scmp.lt.s32.totalorder %s33, 1
          %s569 = scalar_select %p568, %s33, 1
          %s570 = smul.addr %s569, 16
          %s571 = smul.addr %s570, 4
          %s572 = scalar_lea.vmem %s11, %s571
        $region76: #{gpt2_forward.1} parent=27 // pred_fallthru
          _
        // Predicated region
        $region77: #{gpt2_forward.1} parent=27 // pred_check
          %p573 = pneg %p369
        $region78: #{gpt2_forward.1} parent=27 // pred_check_branch
          %575 = sbr.rel (%p573) target = $region80
        $region79: #{gpt2_forward.1} parent=27 // pred_region
          %p576 = scmp.lt.s32.totalorder %s33, 1
          %s577 = scalar_select %p576, %s33, 1
          %s578 = scalar_lea.vmem %s12, %s577
        $region80: #{gpt2_forward.1} parent=27 // pred_fallthru
          _
      $region28: #{gpt2_forward.1} parent=5 // pred_fallthru
        _
      %p579 = scmp.le.s32.totalorder 1, %s25
      %p580 = scmp.lt.s32.totalorder %s25, 5
      %p581 = pnand %p579, %p580
      %p582 = pneg %p581
      // Predicated region
      $region81: #{gpt2_forward.1} parent=5 // pred_check
        _
      $region82: #{gpt2_forward.1} parent=5 // pred_check_branch
        %584 = sbr.rel (%p581) target = $region84
      $region83: #{gpt2_forward.1} parent=5 // pred_region
        %s585 = ssub.s32 %s25, 1
        %p586 = scmp.lt.s32.totalorder %s34, 1
        %s587 = scalar_select %p586, %s34, 1
        %s588 = smul.addr %s587, 8
        %s589 = scalar_lea.vmem %s0, %s588
        %p590 = pneg %p63
        %p591 = pneg %p60
        %p592 = scmp.lt.s32.totalorder %s35, 1
        %s593 = scalar_select %p592, %s35, 1
        %s594 = scalar_lea.vmem %s1, %s593
        %p595 = pneg %p89
        %p596 = pneg %p86
        %p597 = scmp.lt.s32.totalorder %s35, 1
        %s598 = scalar_select %p597, %s35, 1
        %s599 = scalar_lea.vmem %s2, %s598
        %p600 = pneg %p115
        %p601 = pneg %p112
        %p602 = scmp.lt.s32.totalorder %s35, 1
        %s603 = scalar_select %p602, %s35, 1
        %s604 = smul.addr %s603, 4
        %s605 = smul.addr %s604, 4
        %s606 = scalar_lea.vmem %s3, %s605
        %p607 = pneg %p141
        %p608 = pneg %p138
        %p609 = scmp.lt.s32.totalorder %s35, 1
        %s610 = scalar_select %p609, %s35, 1
        %s611 = scalar_lea.vmem %s4, %s610
        %p612 = pneg %p167
        %p613 = pneg %p164
        %p614 = scmp.lt.s32.totalorder %s35, 1
        %s615 = scalar_select %p614, %s35, 1
        %s616 = smul.addr %s615, 4
        %s617 = smul.addr %s616, 4
        %s618 = scalar_lea.vmem %s5, %s617
        %p619 = pneg %p193
        %p620 = pneg %p190
        %p621 = scmp.lt.s32.totalorder %s35, 1
        %s622 = scalar_select %p621, %s35, 1
        %s623 = scalar_lea.vmem %s6, %s622
        %p624 = pneg %p219
        %p625 = pneg %p216
        %p626 = scmp.lt.s32.totalorder %s35, 1
        %s627 = scalar_select %p626, %s35, 1
        %s628 = scalar_lea.vmem %s7, %s627
        %p629 = pneg %p245
        %p630 = pneg %p242
        %p631 = scmp.lt.s32.totalorder %s35, 1
        %s632 = scalar_select %p631, %s35, 1
        %s633 = scalar_lea.vmem %s8, %s632
        %p634 = pneg %p271
        %p635 = pneg %p268
        %p636 = scmp.lt.s32.totalorder %s35, 1
        %s637 = scalar_select %p636, %s35, 1
        %s638 = smul.addr %s637, 4
        %s639 = smul.addr %s638, 4
        %s640 = scalar_lea.vmem %s9, %s639
        %p641 = pneg %p297
        %p642 = pneg %p294
        %p643 = scmp.lt.s32.totalorder %s35, 1
        %s644 = scalar_select %p643, %s35, 1
        %s645 = scalar_lea.vmem %s10, %s644
        %p646 = pneg %p323
        %p647 = pneg %p320
        %p648 = scmp.lt.s32.totalorder %s35, 1
        %s649 = scalar_select %p648, %s35, 1
        %s650 = smul.addr %s649, 16
        %s651 = smul.addr %s650, 4
        %s652 = scalar_lea.vmem %s11, %s651
        %p653 = pneg %p349
        %p654 = pneg %p346
        %p655 = scmp.lt.s32.totalorder %s35, 1
        %s656 = scalar_select %p655, %s35, 1
        %s657 = scalar_lea.vmem %s12, %s656
        %p658 = pneg %p375
        %p659 = pneg %p372
        %p660 = pneg %p396
        %p661 = pneg %p393
        %p662 = pneg %p417
        %p663 = pneg %p414
        %p664 = pneg %p438
        %p665 = pneg %p435
        %p666 = pneg %p464
        %p667 = pneg %p461
        %s668 = sand.u32 %s451, 1
        %s669 = scalar_lea.sflag [#allocation4], %s668
        %s670 = sand.u32 %s451, 1
        %s671 = smul.addr %s670, 8
        %s672 = scalar_lea.vmem [#allocation3], %s671
        %p673 = scmp.lt.s32.totalorder %s34, 1
        %s674 = scalar_select %p673, %s34, 1
        %s675 = smul.addr %s674, 8
        %s676 = scalar_lea.vmem %s0, %s675
        %p677 = scmp.lt.s32.totalorder %s35, 1
        %s678 = scalar_select %p677, %s35, 1
        %s679 = scalar_lea.vmem %s1, %s678
        %p680 = scmp.lt.s32.totalorder %s35, 1
        %s681 = scalar_select %p680, %s35, 1
        %s682 = scalar_lea.vmem %s2, %s681
        %p683 = scmp.lt.s32.totalorder %s35, 1
        %s684 = scalar_select %p683, %s35, 1
        %s685 = smul.addr %s684, 4
        %s686 = smul.addr %s685, 4
        %s687 = scalar_lea.vmem %s3, %s686
        %p688 = scmp.lt.s32.totalorder %s35, 1
        %s689 = scalar_select %p688, %s35, 1
        %s690 = scalar_lea.vmem %s4, %s689
        %p691 = scmp.lt.s32.totalorder %s35, 1
        %s692 = scalar_select %p691, %s35, 1
        %s693 = smul.addr %s692, 4
        %s694 = smul.addr %s693, 4
        %s695 = scalar_lea.vmem %s5, %s694
        %p696 = scmp.lt.s32.totalorder %s35, 1
        %s697 = scalar_select %p696, %s35, 1
        %s698 = scalar_lea.vmem %s6, %s697
        %p699 = scmp.lt.s32.totalorder %s35, 1
        %s700 = scalar_select %p699, %s35, 1
        %s701 = scalar_lea.vmem %s7, %s700
        %p702 = scmp.lt.s32.totalorder %s35, 1
        %s703 = scalar_select %p702, %s35, 1
        %s704 = scalar_lea.vmem %s8, %s703
        %p705 = scmp.lt.s32.totalorder %s35, 1
        %s706 = scalar_select %p705, %s35, 1
        %s707 = smul.addr %s706, 4
        %s708 = smul.addr %s707, 4
        %s709 = scalar_lea.vmem %s9, %s708
        %p710 = scmp.lt.s32.totalorder %s35, 1
        %s711 = scalar_select %p710, %s35, 1
        %s712 = scalar_lea.vmem %s10, %s711
        %p713 = scmp.lt.s32.totalorder %s35, 1
        %s714 = scalar_select %p713, %s35, 1
        %s715 = smul.addr %s714, 16
        %s716 = smul.addr %s715, 4
        %s717 = scalar_lea.vmem %s11, %s716
        %p718 = scmp.lt.s32.totalorder %s35, 1
        %s719 = scalar_select %p718, %s35, 1
        %s720 = scalar_lea.vmem %s12, %s719
        %p722 = scmp.eq.s32.totalorder %s35, 0
        // Predicated region
        $region85: #{gpt2_forward.1} parent=83 // pred_check
          %p723 = pneg %p722
        $region86: #{gpt2_forward.1} parent=83 // pred_check_branch
          %725 = sbr.rel (%p723) target = $region88
        $region87: #{gpt2_forward.1} parent=83 // pred_region
          %v726 = vld [vmem:[%s676] sm:$0xff]
          %vm727 = vcmask 261120
          %728 = vst.msk [vmem:[#allocation2] sm:$0xff] %vm727, %v726
        $region88: #{gpt2_forward.1} parent=83 // pred_fallthru
          _
        %v729 = vld [vmem:[#allocation2] sm:$0xff]
        %v730 = vlaneseq
        %v731 = vshrl.u32 %v730, 7
        %v732 = vlaneseq
        %v733 = vand.u32 %v732, 127
        %vm734 = vcmp.le.s32.totalorder %v733, %v731
        %v735 = vld [vmem:[%s679] sm:$0x1]
        %v736 = vld [vmem:[%s682] sm:$0x1]
        %vm737 = vcmask 261120
        %v738 = vsel %vm737, %v729, 0.0
        %739 = vadd.xlane.f32.xlu0 %v738
        %v740 = vpop.xlane.xlu0 %739
        %v741 = vrcp.pop 32.0
        %v742 = vmul.f32 32.0, %v741
        %v743 = vsub.f32 1.0, %v742
        %v744 = vmul.f32 %v741, %v743
        %v745 = vadd.f32 %v741, %v744
        %vm746 = vweird.f32 %v741
        %v747 = vsel %vm746, %v741, %v745
        %v748 = vmul.f32 %v740, %v747
        %v749 = vsub.f32 %v729, %v748
        %v750 = vmul.f32 %v749, %v749
        %v751 = vsel %vm737, %v750, 0.0
        %752 = vadd.xlane.f32.xlu0 %v751
        %v753 = vpop.xlane.xlu0 %752
        %v754 = vmul.f32 %v753, %v747
        %v755 = vadd.f32 %v754, 1e-05
        %v756 = vrsqrt.pop %v755
        %v757 = vmul.f32 %v756, %v755
        %v758 = vmul.f32 %v757, %v756
        %v759 = vmul.f32 0.5, %v758
        %v760 = vsub.f32 1.5, %v759
        %v761 = vmul.f32 %v756, %v760
        %vm762 = vweird.f32 %v755
        %vm763 = vweird.f32 %v756
        %vm764 = vmor %vm762, %vm763
        %v765 = vsel %vm764, %v756, %v761
        %v766 = vmul.f32 %v749, %v765
        %v768 = vperm.slane %v735, 0
        %v770 = vmul.f32 %v766, %v768
        %v772 = vperm.slane %v736, 0
        %v774 = vadd.f32 %v770, %v772
        %v775 = vld [vmem:[%s687] sm:$0xf]
        %v776 = vld [vmem:[%s687 + $0x4] sm:$0xf]
        %v777 = vld [vmem:[%s687 + $0x8] sm:$0xf]
        %v778 = vld [vmem:[%s687 + $0xc] sm:$0xf]
        %v779 = vpack.c.bf16 %v774, %v774
        %v780 = vld [vmem:[%s690] sm:$0x1]
        %v782 = vperm.slane %v780, 0
        %v788 = vunpack.c.l.b16 %v775
        %v789 = vunpack.c.l.b16 %v776
        %v790 = vunpack.c.l.b16 %v777
        %v791 = vunpack.c.l.b16 %v778
        %v792 = vpack.c.b16 %v789, %v788
        %v793 = vpack.c.b16 %v791, %v790
        %v797 = vsel %vm737, %v779, 0
        %799 = vmatpush.bf16.msra.mxu0 0
        %800 = vmatpush.bf16.msra.mxu0 0
        %801 = vmatpush.bf16.msra.mxu0 0
        %802 = vmatpush.bf16.msra.mxu0 0
        %803 = vmatpush.bf16.msra.mxu0 0
        %804 = vmatpush.bf16.msra.mxu0 0
        %805 = vmatpush.bf16.msra.mxu0 %v793
        %806 = vmatpush.bf16.msra.mxu0 %v792
        %807 = vmatmul.bf16.gmra.mxu0 %v797
        %v808 = vpop.f32.mrf.mxu0
        %v809 = vadd.f32 %v782, %v808
        %v810 = vpop.f32.mrf.mxu0
        %811 = vdwg.mxu0
        %v812 = vld [vmem:[%s695] sm:$0xf]
        %v813 = vld [vmem:[%s695 + $0x4] sm:$0xf]
        %v814 = vld [vmem:[%s695 + $0x8] sm:$0xf]
        %v815 = vld [vmem:[%s695 + $0xc] sm:$0xf]
        %v816 = vpack.c.bf16 %v809, %v809
        %818 = vrot.lane.b32.xlu0 %v816, 96
        %v819 = vpop.permute.xlu0 %818
        %vm820 = vcmask 64512
        %v822 = vsel %vm820, %v816, 0
        %v825 = vsel %vm820, %v819, 0
        %827 = vmatpush.bf16.xpose.msra.mxu0 0
        %828 = vmatpush.bf16.xpose.msra.mxu0 0
        %829 = vmatpush.bf16.xpose.msra.mxu0 0
        %830 = vmatpush.bf16.xpose.msra.mxu0 0
        %831 = vmatpush.bf16.xpose.msra.mxu0 0
        %832 = vmatpush.bf16.xpose.msra.mxu0 0
        %833 = vmatpush.bf16.xpose.msra.mxu0 0
        %834 = vmatpush.bf16.xpose.msra.mxu0 %v825
        %835 = vmatmul.bf16.gmra.mxu0 %v822
        %v836 = vpop.f32.mrf.mxu0
        %v837 = vadd.f32 0.0, %v836
        %v838 = vpop.f32.mrf.mxu0
        %839 = vdwg.mxu0
        %v840 = vmul.f32 %v837, 0.35355338
        %v841 = vsel %vm734, %v840, -1e+30
        %v842 = vsel %vm820, %v841, -inf
        %843 = vmax.xlane.f32.xlu0 %v842
        %v844 = vpop.xlane.xlu0 %843
        %v845 = vsub.f32 %v841, %v844
        %v846 = vmul.f32 %v845, 1.442695
        %v847 = vpow.pop %v846
        %v848 = vsel %vm820, %v847, 0.0
        %849 = vadd.xlane.f32.xlu0 %v848
        %v850 = vpop.xlane.xlu0 %849
        %v851 = vrcp.pop %v850
        %v852 = vmul.f32 %v847, %v851
        %v853 = vpack.c.bf16 %v852, %v852
        %854 = vrot.lane.b32.xlu0 %v816, 64
        %v855 = vpop.permute.xlu0 %854
        %v857 = vsel %vm820, %v853, 0
        %vm859 = vcmask 1043456
        %v861 = vsel %vm859, %v855, 0
        %863 = vmatpush.bf16.msra.mxu0 0
        %864 = vmatpush.bf16.msra.mxu0 0
        %865 = vmatpush.bf16.msra.mxu0 0
        %866 = vmatpush.bf16.msra.mxu0 0
        %867 = vmatpush.bf16.msra.mxu0 0
        %868 = vmatpush.bf16.msra.mxu0 0
        %869 = vmatpush.bf16.msra.mxu0 0
        %870 = vmatpush.bf16.msra.mxu0 %v861
        %871 = vmatmul.bf16.gmra.mxu0 %v857
        %v872 = vpop.f32.mrf.mxu0
        %v873 = vadd.f32 0.0, %v872
        %v874 = vpop.f32.mrf.mxu0
        %875 = vdwg.mxu0
        %v876 = vpack.c.bf16 %v873, %v873
        %877 = vrot.lane.b32.xlu0 %v816, 120
        %v878 = vpop.permute.xlu0 %877
        %879 = vrot.lane.b32.xlu0 %v816, 88
        %v880 = vpop.permute.xlu0 %879
        %v882 = vsel %vm820, %v878, 0
        %v885 = vsel %vm820, %v880, 0
        %887 = vmatpush.bf16.xpose.msra.mxu0 0
        %888 = vmatpush.bf16.xpose.msra.mxu0 0
        %889 = vmatpush.bf16.xpose.msra.mxu0 0
        %890 = vmatpush.bf16.xpose.msra.mxu0 0
        %891 = vmatpush.bf16.xpose.msra.mxu0 0
        %892 = vmatpush.bf16.xpose.msra.mxu0 0
        %893 = vmatpush.bf16.xpose.msra.mxu0 0
        %894 = vmatpush.bf16.xpose.msra.mxu0 %v885
        %895 = vmatmul.bf16.gmra.mxu0 %v882
        %v896 = vpop.f32.mrf.mxu0
        %v897 = vadd.f32 0.0, %v896
        %v898 = vpop.f32.mrf.mxu0
        %899 = vdwg.mxu0
        %v900 = vmul.f32 %v897, 0.35355338
        %v901 = vsel %vm734, %v900, -1e+30
        %v902 = vsel %vm820, %v901, -inf
        %903 = vmax.xlane.f32.xlu0 %v902
        %v904 = vpop.xlane.xlu0 %903
        %v905 = vsub.f32 %v901, %v904
        %v906 = vmul.f32 %v905, 1.442695
        %v907 = vpow.pop %v906
        %v908 = vsel %vm820, %v907, 0.0
        %909 = vadd.xlane.f32.xlu0 %v908
        %v910 = vpop.xlane.xlu0 %909
        %v911 = vrcp.pop %v910
        %v912 = vmul.f32 %v907, %v911
        %v913 = vpack.c.bf16 %v912, %v912
        %914 = vrot.lane.b32.xlu0 %v816, 56
        %v915 = vpop.permute.xlu0 %914
        %v917 = vsel %vm820, %v913, 0
        %v920 = vsel %vm859, %v915, 0
        %922 = vmatpush.bf16.msra.mxu0 0
        %923 = vmatpush.bf16.msra.mxu0 0
        %924 = vmatpush.bf16.msra.mxu0 0
        %925 = vmatpush.bf16.msra.mxu0 0
        %926 = vmatpush.bf16.msra.mxu0 0
        %927 = vmatpush.bf16.msra.mxu0 0
        %928 = vmatpush.bf16.msra.mxu0 0
        %929 = vmatpush.bf16.msra.mxu0 %v920
        %930 = vmatmul.bf16.gmra.mxu0 %v917
        %v931 = vpop.f32.mrf.mxu0
        %v932 = vadd.f32 0.0, %v931
        %v933 = vpop.f32.mrf.mxu0
        %934 = vdwg.mxu0
        %v935 = vpack.c.bf16 %v932, %v932
        %v937 = vsel %vm820, %v935, 0
        %v940 = vsel %vm859, %v813, 0
        %942 = vmatpush.bf16.msra.mxu0 0
        %943 = vmatpush.bf16.msra.mxu0 0
        %944 = vmatpush.bf16.msra.mxu0 0
        %945 = vmatpush.bf16.msra.mxu0 0
        %946 = vmatpush.bf16.msra.mxu0 0
        %947 = vmatpush.bf16.msra.mxu0 0
        %948 = vmatpush.bf16.msra.mxu0 0
        %949 = vmatpush.bf16.msra.mxu0 %v940
        %950 = vmatmul.bf16.gmra.mxu0 %v937
        %v951 = vpop.f32.mrf.mxu0
        %v952 = vadd.f32 0.0, %v951
        %v953 = vpop.f32.mrf.mxu0
        %954 = vdwg.mxu0
        %v956 = vsel %vm820, %v876, 0
        %v959 = vsel %vm859, %v812, 0
        %961 = vmatpush.bf16.msra.mxu0 0
        %962 = vmatpush.bf16.msra.mxu0 0
        %963 = vmatpush.bf16.msra.mxu0 0
        %964 = vmatpush.bf16.msra.mxu0 0
        %965 = vmatpush.bf16.msra.mxu0 0
        %966 = vmatpush.bf16.msra.mxu0 0
        %967 = vmatpush.bf16.msra.mxu0 0
        %968 = vmatpush.bf16.msra.mxu0 %v959
        %969 = vmatmul.bf16.gmra.mxu0 %v956
        %v970 = vpop.f32.mrf.mxu0
        %v971 = vadd.f32 %v952, %v970
        %v972 = vpop.f32.mrf.mxu0
        %973 = vdwg.mxu0
        %974 = vrot.lane.b32.xlu0 %v816, 112
        %v975 = vpop.permute.xlu0 %974
        %976 = vrot.lane.b32.xlu0 %v816, 80
        %v977 = vpop.permute.xlu0 %976
        %v979 = vsel %vm820, %v975, 0
        %v982 = vsel %vm820, %v977, 0
        %984 = vmatpush.bf16.xpose.msra.mxu0 0
        %985 = vmatpush.bf16.xpose.msra.mxu0 0
        %986 = vmatpush.bf16.xpose.msra.mxu0 0
        %987 = vmatpush.bf16.xpose.msra.mxu0 0
        %988 = vmatpush.bf16.xpose.msra.mxu0 0
        %989 = vmatpush.bf16.xpose.msra.mxu0 0
        %990 = vmatpush.bf16.xpose.msra.mxu0 0
        %991 = vmatpush.bf16.xpose.msra.mxu0 %v982
        %992 = vmatmul.bf16.gmra.mxu0 %v979
        %v993 = vpop.f32.mrf.mxu0
        %v994 = vadd.f32 0.0, %v993
        %v995 = vpop.f32.mrf.mxu0
        %996 = vdwg.mxu0
        %v997 = vmul.f32 %v994, 0.35355338
        %v998 = vsel %vm734, %v997, -1e+30
        %v999 = vsel %vm820, %v998, -inf
        %1000 = vmax.xlane.f32.xlu0 %v999
        %v1001 = vpop.xlane.xlu0 %1000
        %v1002 = vsub.f32 %v998, %v1001
        %v1003 = vmul.f32 %v1002, 1.442695
        %v1004 = vpow.pop %v1003
        %v1005 = vsel %vm820, %v1004, 0.0
        %1006 = vadd.xlane.f32.xlu0 %v1005
        %v1007 = vpop.xlane.xlu0 %1006
        %v1008 = vrcp.pop %v1007
        %v1009 = vmul.f32 %v1004, %v1008
        %v1010 = vpack.c.bf16 %v1009, %v1009
        %1011 = vrot.lane.b32.xlu0 %v816, 48
        %v1012 = vpop.permute.xlu0 %1011
        %v1014 = vsel %vm820, %v1010, 0
        %v1017 = vsel %vm859, %v1012, 0
        %1019 = vmatpush.bf16.msra.mxu0 0
        %1020 = vmatpush.bf16.msra.mxu0 0
        %1021 = vmatpush.bf16.msra.mxu0 0
        %1022 = vmatpush.bf16.msra.mxu0 0
        %1023 = vmatpush.bf16.msra.mxu0 0
        %1024 = vmatpush.bf16.msra.mxu0 0
        %1025 = vmatpush.bf16.msra.mxu0 0
        %1026 = vmatpush.bf16.msra.mxu0 %v1017
        %1027 = vmatmul.bf16.gmra.mxu0 %v1014
        %v1028 = vpop.f32.mrf.mxu0
        %v1029 = vadd.f32 0.0, %v1028
        %v1030 = vpop.f32.mrf.mxu0
        %1031 = vdwg.mxu0
        %v1032 = vpack.c.bf16 %v1029, %v1029
        %v1034 = vsel %vm820, %v1032, 0
        %v1037 = vsel %vm859, %v814, 0
        %1039 = vmatpush.bf16.msra.mxu0 0
        %1040 = vmatpush.bf16.msra.mxu0 0
        %1041 = vmatpush.bf16.msra.mxu0 0
        %1042 = vmatpush.bf16.msra.mxu0 0
        %1043 = vmatpush.bf16.msra.mxu0 0
        %1044 = vmatpush.bf16.msra.mxu0 0
        %1045 = vmatpush.bf16.msra.mxu0 0
        %1046 = vmatpush.bf16.msra.mxu0 %v1037
        %1047 = vmatmul.bf16.gmra.mxu0 %v1034
        %v1048 = vpop.f32.mrf.mxu0
        %v1049 = vadd.f32 0.0, %v1048
        %v1050 = vpop.f32.mrf.mxu0
        %1051 = vdwg.mxu0
        %v1052 = vadd.f32 %v971, %v1049
        %1053 = vrot.lane.b32.xlu0 %v816, 104
        %v1054 = vpop.permute.xlu0 %1053
        %1055 = vrot.lane.b32.xlu0 %v816, 72
        %v1056 = vpop.permute.xlu0 %1055
        %v1058 = vsel %vm820, %v1054, 0
        %v1061 = vsel %vm820, %v1056, 0
        %1063 = vmatpush.bf16.xpose.msra.mxu0 0
        %1064 = vmatpush.bf16.xpose.msra.mxu0 0
        %1065 = vmatpush.bf16.xpose.msra.mxu0 0
        %1066 = vmatpush.bf16.xpose.msra.mxu0 0
        %1067 = vmatpush.bf16.xpose.msra.mxu0 0
        %1068 = vmatpush.bf16.xpose.msra.mxu0 0
        %1069 = vmatpush.bf16.xpose.msra.mxu0 0
        %1070 = vmatpush.bf16.xpose.msra.mxu0 %v1061
        %1071 = vmatmul.bf16.gmra.mxu0 %v1058
        %v1072 = vpop.f32.mrf.mxu0
        %v1073 = vadd.f32 0.0, %v1072
        %v1074 = vpop.f32.mrf.mxu0
        %1075 = vdwg.mxu0
        %v1076 = vmul.f32 %v1073, 0.35355338
        %v1077 = vsel %vm734, %v1076, -1e+30
        %v1078 = vsel %vm820, %v1077, -inf
        %1079 = vmax.xlane.f32.xlu0 %v1078
        %v1080 = vpop.xlane.xlu0 %1079
        %v1081 = vsub.f32 %v1077, %v1080
        %v1082 = vmul.f32 %v1081, 1.442695
        %v1083 = vpow.pop %v1082
        %v1084 = vsel %vm820, %v1083, 0.0
        %1085 = vadd.xlane.f32.xlu0 %v1084
        %v1086 = vpop.xlane.xlu0 %1085
        %v1087 = vrcp.pop %v1086
        %v1088 = vmul.f32 %v1083, %v1087
        %v1089 = vpack.c.bf16 %v1088, %v1088
        %1090 = vrot.lane.b32.xlu0 %v816, 40
        %v1091 = vpop.permute.xlu0 %1090
        %v1093 = vsel %vm820, %v1089, 0
        %v1096 = vsel %vm859, %v1091, 0
        %1098 = vmatpush.bf16.msra.mxu0 0
        %1099 = vmatpush.bf16.msra.mxu0 0
        %1100 = vmatpush.bf16.msra.mxu0 0
        %1101 = vmatpush.bf16.msra.mxu0 0
        %1102 = vmatpush.bf16.msra.mxu0 0
        %1103 = vmatpush.bf16.msra.mxu0 0
        %1104 = vmatpush.bf16.msra.mxu0 0
        %1105 = vmatpush.bf16.msra.mxu0 %v1096
        %1106 = vmatmul.bf16.gmra.mxu0 %v1093
        %v1107 = vpop.f32.mrf.mxu0
        %v1108 = vadd.f32 0.0, %v1107
        %v1109 = vpop.f32.mrf.mxu0
        %1110 = vdwg.mxu0
        %v1111 = vpack.c.bf16 %v1108, %v1108
        %v1113 = vsel %vm820, %v1111, 0
        %v1116 = vsel %vm859, %v815, 0
        %1118 = vmatpush.bf16.msra.mxu0 0
        %1119 = vmatpush.bf16.msra.mxu0 0
        %1120 = vmatpush.bf16.msra.mxu0 0
        %1121 = vmatpush.bf16.msra.mxu0 0
        %1122 = vmatpush.bf16.msra.mxu0 0
        %1123 = vmatpush.bf16.msra.mxu0 0
        %1124 = vmatpush.bf16.msra.mxu0 0
        %1125 = vmatpush.bf16.msra.mxu0 %v1116
        %1126 = vmatmul.bf16.gmra.mxu0 %v1113
        %v1127 = vpop.f32.mrf.mxu0
        %v1128 = vadd.f32 0.0, %v1127
        %v1129 = vpop.f32.mrf.mxu0
        %1130 = vdwg.mxu0
        %v1131 = vadd.f32 %v1052, %v1128
        %v1132 = vadd.f32 %v729, %v1131
        %v1133 = vld [vmem:[%s698] sm:$0x1]
        %v1135 = vperm.slane %v1133, 0
        %v1137 = vadd.f32 %v1132, %v1135
        %v1138 = vld [vmem:[%s701] sm:$0x1]
        %v1139 = vld [vmem:[%s704] sm:$0x1]
        %v1140 = vsel %vm737, %v1137, 0.0
        %1141 = vadd.xlane.f32.xlu0 %v1140
        %v1142 = vpop.xlane.xlu0 %1141
        %v1143 = vmul.f32 %v1142, %v747
        %v1144 = vsub.f32 %v1137, %v1143
        %v1145 = vmul.f32 %v1144, %v1144
        %v1146 = vsel %vm737, %v1145, 0.0
        %1147 = vadd.xlane.f32.xlu0 %v1146
        %v1148 = vpop.xlane.xlu0 %1147
        %v1149 = vmul.f32 %v1148, %v747
        %v1150 = vadd.f32 %v1149, 1e-05
        %v1151 = vrsqrt.pop %v1150
        %v1152 = vmul.f32 %v1151, %v1150
        %v1153 = vmul.f32 %v1152, %v1151
        %v1154 = vmul.f32 0.5, %v1153
        %v1155 = vsub.f32 1.5, %v1154
        %v1156 = vmul.f32 %v1151, %v1155
        %vm1157 = vweird.f32 %v1150
        %vm1158 = vweird.f32 %v1151
        %vm1159 = vmor %vm1157, %vm1158
        %v1160 = vsel %vm1159, %v1151, %v1156
        %v1161 = vmul.f32 %v1144, %v1160
        %v1163 = vperm.slane %v1138, 0
        %v1165 = vmul.f32 %v1161, %v1163
        %v1167 = vperm.slane %v1139, 0
        %v1169 = vadd.f32 %v1165, %v1167
        %v1170 = vld [vmem:[%s709] sm:$0xf]
        %v1171 = vld [vmem:[%s709 + $0x4] sm:$0xf]
        %v1172 = vld [vmem:[%s709 + $0x8] sm:$0xf]
        %v1173 = vld [vmem:[%s709 + $0xc] sm:$0xf]
        %v1174 = vpack.c.bf16 %v1169, %v1169
        %v1175 = vld [vmem:[%s712] sm:$0x1]
        %v1177 = vperm.slane %v1175, 0
        %v1183 = vunpack.c.l.b16 %v1170
        %v1184 = vunpack.c.l.b16 %v1171
        %v1185 = vunpack.c.l.b16 %v1172
        %v1186 = vunpack.c.l.b16 %v1173
        %v1187 = vpack.c.b16 %v1184, %v1183
        %v1188 = vpack.c.b16 %v1186, %v1185
        %v1192 = vsel %vm737, %v1174, 0
        %1194 = vmatpush.bf16.msra.mxu0 0
        %1195 = vmatpush.bf16.msra.mxu0 0
        %1196 = vmatpush.bf16.msra.mxu0 0
        %1197 = vmatpush.bf16.msra.mxu0 0
        %1198 = vmatpush.bf16.msra.mxu0 0
        %1199 = vmatpush.bf16.msra.mxu0 0
        %1200 = vmatpush.bf16.msra.mxu0 %v1188
        %1201 = vmatpush.bf16.msra.mxu0 %v1187
        %1202 = vmatmul.bf16.gmra.mxu0 %v1192
        %v1203 = vpop.f32.mrf.mxu0
        %v1204 = vadd.f32 %v1177, %v1203
        %v1205 = vpop.f32.mrf.mxu0
        %1206 = vdwg.mxu0
        %v1207 = vmul.f32 %v1204, 0.5
        %v1208 = vmul.f32 %v1204, 0.044715
        %v1209 = vmul.f32 %v1208, %v1204
        %v1210 = vmul.f32 %v1209, %v1204
        %v1211 = vadd.f32 %v1204, %v1210
        %v1212 = vmul.f32 %v1211, 0.7978846
        %v1213 = vtanh.pop %v1212
        %v1214 = vadd.f32 %v1213, 1.0
        %v1215 = vmul.f32 %v1207, %v1214
        %v1216 = vld [vmem:[%s717] sm:$0xf]
        %v1217 = vld [vmem:[%s717 + $0x4] sm:$0xf]
        %v1218 = vld [vmem:[%s717 + $0x8] sm:$0xf]
        %v1219 = vld [vmem:[%s717 + $0xc] sm:$0xf]
        %v1220 = vld [vmem:[%s717 + $0x10] sm:$0xf]
        %v1221 = vld [vmem:[%s717 + $0x14] sm:$0xf]
        %v1222 = vld [vmem:[%s717 + $0x18] sm:$0xf]
        %v1223 = vld [vmem:[%s717 + $0x1c] sm:$0xf]
        %v1224 = vld [vmem:[%s717 + $0x20] sm:$0xf]
        %v1225 = vld [vmem:[%s717 + $0x24] sm:$0xf]
        %v1226 = vld [vmem:[%s717 + $0x28] sm:$0xf]
        %v1227 = vld [vmem:[%s717 + $0x2c] sm:$0xf]
        %v1228 = vld [vmem:[%s717 + $0x30] sm:$0xf]
        %v1229 = vld [vmem:[%s717 + $0x34] sm:$0xf]
        %v1230 = vld [vmem:[%s717 + $0x38] sm:$0xf]
        %v1231 = vld [vmem:[%s717 + $0x3c] sm:$0xf]
        %v1232 = vpack.c.bf16 %v1215, %v1215
        %v1249 = vunpack.c.l.b16 %v1216
        %v1250 = vunpack.c.l.b16 %v1217
        %v1251 = vunpack.c.l.b16 %v1218
        %v1252 = vunpack.c.l.b16 %v1219
        %v1253 = vunpack.c.l.b16 %v1220
        %v1254 = vunpack.c.l.b16 %v1221
        %v1255 = vunpack.c.l.b16 %v1222
        %v1256 = vunpack.c.l.b16 %v1223
        %v1257 = vunpack.c.l.b16 %v1224
        %v1258 = vunpack.c.l.b16 %v1225
        %v1259 = vunpack.c.l.b16 %v1226
        %v1260 = vunpack.c.l.b16 %v1227
        %v1261 = vunpack.c.l.b16 %v1228
        %v1262 = vunpack.c.l.b16 %v1229
        %v1263 = vunpack.c.l.b16 %v1230
        %v1264 = vunpack.c.l.b16 %v1231
        %v1265 = vpack.c.b16 %v1250, %v1249
        %v1266 = vpack.c.b16 %v1252, %v1251
        %v1267 = vpack.c.b16 %v1254, %v1253
        %v1268 = vpack.c.b16 %v1256, %v1255
        %v1269 = vpack.c.b16 %v1258, %v1257
        %v1270 = vpack.c.b16 %v1260, %v1259
        %v1271 = vpack.c.b16 %v1262, %v1261
        %v1272 = vpack.c.b16 %v1264, %v1263
        %1281 = vmatpush.bf16.msra.mxu0 %v1272
        %1282 = vmatpush.bf16.msra.mxu0 %v1271
        %1283 = vmatpush.bf16.msra.mxu0 %v1270
        %1284 = vmatpush.bf16.msra.mxu0 %v1269
        %1285 = vmatpush.bf16.msra.mxu0 %v1268
        %1286 = vmatpush.bf16.msra.mxu0 %v1267
        %1287 = vmatpush.bf16.msra.mxu0 %v1266
        %1288 = vmatpush.bf16.msra.mxu0 %v1265
        %1289 = vmatmul.bf16.gmra.mxu0 %v1232
        %v1290 = vpop.f32.mrf.mxu0
        %v1291 = vadd.f32 0.0, %v1290
        %v1292 = vpop.f32.mrf.mxu0
        %1293 = vdwg.mxu0
        %v1294 = vadd.f32 %v1137, %v1291
        %v1295 = vld [vmem:[%s720] sm:$0x1]
        %v1297 = vperm.slane %v1295, 0
        %v1299 = vadd.f32 %v1294, %v1297
        %1300 = vst.msk [vmem:[#allocation2] sm:$0xff] %vm737, %v1299
        %p1301 = scmp.eq.s32.totalorder %s35, 1
        // Predicated region
        $region89: #{gpt2_forward.1} parent=83 // pred_check
          %p1302 = pneg %p1301
        $region90: #{gpt2_forward.1} parent=83 // pred_check_branch
          %1304 = sbr.rel (%p1302) target = $region92
        $region91: #{gpt2_forward.1} parent=83 // pred_region
          %v1305 = vld [vmem:[%s13] sm:$0x1]
          %v1306 = vld [vmem:[%s14] sm:$0x1]
          %v1307 = vsel %vm737, %v1299, 0.0
          %1308 = vadd.xlane.f32.xlu0 %v1307
          %v1309 = vpop.xlane.xlu0 %1308
          %v1310 = vmul.f32 %v1309, %v747
          %v1311 = vsub.f32 %v1299, %v1310
          %v1312 = vmul.f32 %v1311, %v1311
          %v1313 = vsel %vm737, %v1312, 0.0
          %1314 = vadd.xlane.f32.xlu0 %v1313
          %v1315 = vpop.xlane.xlu0 %1314
          %v1316 = vmul.f32 %v1315, %v747
          %v1317 = vadd.f32 %v1316, 1e-05
          %v1318 = vrsqrt.pop %v1317
          %v1319 = vmul.f32 %v1318, %v1317
          %v1320 = vmul.f32 %v1319, %v1318
          %v1321 = vmul.f32 0.5, %v1320
          %v1322 = vsub.f32 1.5, %v1321
          %v1323 = vmul.f32 %v1318, %v1322
          %vm1324 = vweird.f32 %v1317
          %vm1325 = vweird.f32 %v1318
          %vm1326 = vmor %vm1324, %vm1325
          %v1327 = vsel %vm1326, %v1318, %v1323
          %v1328 = vmul.f32 %v1311, %v1327
          %v1330 = vperm.slane %v1305, 0
          %v1332 = vmul.f32 %v1328, %v1330
          %v1334 = vperm.slane %v1306, 0
          %v1336 = vadd.f32 %v1332, %v1334
          %v1337 = vld [vmem:[%s15] sm:$0xf]
          %v1338 = vld [vmem:[%s15 + $0x4] sm:$0xf]
          %v1339 = vld [vmem:[%s15 + $0x8] sm:$0xf]
          %v1340 = vld [vmem:[%s15 + $0xc] sm:$0xf]
          %v1341 = vpack.c.bf16 %v1336, %v1336
          %v1346 = vunpack.c.l.b16 %v1337
          %v1347 = vunpack.c.l.b16 %v1338
          %v1348 = vunpack.c.l.b16 %v1339
          %v1349 = vunpack.c.l.b16 %v1340
          %v1350 = vpack.c.b16 %v1347, %v1346
          %v1351 = vpack.c.b16 %v1349, %v1348
          %v1355 = vsel %vm737, %v1341, 0
          %1357 = vmatpush.bf16.msra.mxu0 0
          %1358 = vmatpush.bf16.msra.mxu0 0
          %1359 = vmatpush.bf16.msra.mxu0 0
          %1360 = vmatpush.bf16.msra.mxu0 0
          %1361 = vmatpush.bf16.msra.mxu0 0
          %1362 = vmatpush.bf16.msra.mxu0 0
          %1363 = vmatpush.bf16.msra.mxu0 %v1351
          %1364 = vmatpush.bf16.msra.mxu0 %v1350
          %1365 = vmatmul.bf16.gmra.mxu0 %v1355
          %v1366 = vpop.f32.mrf.mxu0
          %v1367 = vadd.f32 0.0, %v1366
          %v1368 = vpop.f32.mrf.mxu0
          %1369 = vdwg.mxu0
          %1370 = vst [vmem:[%s672] sm:$0xff] %v1367
        $region92: #{gpt2_forward.1} parent=83 // pred_fallthru
          _
        %s1371 = sand.u32 %s451, 1
        %s1372 = scalar_lea.sflag [#allocation4], %s1371
        %s1373 = sand.u32 %s451, 1
        %s1374 = smul.addr %s1373, 8
        %s1375 = scalar_lea.vmem [#allocation3], %s1374
        // Predicated region
        $region93: #{gpt2_forward.1} parent=83 // pred_check
          %p1376 = pneg %p461
        $region94: #{gpt2_forward.1} parent=83 // pred_check_branch
          %1378 = sbr.rel (%p1376) target = $region96
        $region95: #{gpt2_forward.1} parent=83 // pred_region
          %1380 = vsyncadd %s1372, 0
          %s1381 = smul.addr %s34, 8
          %s1382 = scalar_lea.hbm %s16, %s1381
          %s1384 = sshll.u32 %s1375, 4
          %s1385 = int_to_ptr.vmem [resolvable:$true] %s1384
          %s1386 = sshll.u32 %s1382, 4
          %s1387 = int_to_ptr.hbm [resolvable:$true] %s1386
          %1389 = dma.vmem_to_hbm [thread:$0]  %s1385, 128, %s1387, %s1372
        $region96: #{gpt2_forward.1} parent=83 // pred_fallthru
          _
      $region84: #{gpt2_forward.1} parent=5 // pred_fallthru
        _
      %p1390 = scmp.le.s32.totalorder 2, %s25
      // Predicated region
      $region97: #{gpt2_forward.1} parent=5 // pred_check
        %p1391 = pneg %p1390
      $region98: #{gpt2_forward.1} parent=5 // pred_check_branch
        %1393 = sbr.rel (%p1391) target = $region100
      $region99: #{gpt2_forward.1} parent=5 // pred_region
        %s1394 = ssub.s32 %s25, 2
        // Predicated region
        $region101: #{gpt2_forward.1} parent=99 // pred_check
          %p1395 = pneg %p467
        $region102: #{gpt2_forward.1} parent=99 // pred_check_branch
          %1397 = sbr.rel (%p1395) target = $region104
        $region103: #{gpt2_forward.1} parent=99 // pred_region
          %s1398 = sand.u32 %s452, 1
          %s1399 = scalar_lea.sflag [#allocation4], %s1398
          %s1400 = sand.u32 %s452, 1
          %s1401 = smul.addr %s1400, 8
          %s1402 = scalar_lea.vmem [#allocation3], %s1401
          %1404 = dma.done %s1399, 128
        $region104: #{gpt2_forward.1} parent=99 // pred_fallthru
          _
      $region100: #{gpt2_forward.1} parent=5 // pred_fallthru
        _
    $region6: #{gpt2_forward.1} parent=1 // loop_footer
      %s29 = sadd.s32 1, %s25
    $region7: #{gpt2_forward.1} parent=1 // loop_footer_branch
      %24 = sbr.rel target = $region3
    $region8: #{gpt2_forward.1} parent=1 // loop_exit
      _
    %1405 = vsyncpa [#allocation4], 1
    %s1406 = scalar_lea.sflag [#allocation4], 1
    %1407 = vsyncpa %s1406, 1

</llo_original>
